<compile_context>
chip_gen: v7x
topology: tpu7x:2x2x1
jax: 0.10.0
libtpu: 0.0.40
codegen_flags: <defaults>
</compile_context>

<pallas_src>
import functools
import math

import jax
import jax.numpy as jnp
from jax.experimental import pallas as pl
from jax.experimental.pallas import tpu as pltpu

IMAGE_SIZE = 32
PATCH = 8
EMBED = 64
HEADS = 4
HEAD_DIM = EMBED // HEADS
LAYERS = 2
CLASSES = 10
FF = EMBED * 2
NUM_PATCHES = (IMAGE_SIZE // PATCH) ** 2
LN_EPS = 1e-5
LANE = 128       # slab lane width / padded classifier width
OUT_ROWS = 8     # output rows padded to 8 sublanes (unmasked store)
MAX_BATCH = 8


# ---------------------------------------------------------------------------
# Slab layouts (all blocks <= 128 lanes; fused QKV weights live in their own
# 192-lane input).  slab0 = prologue + layer-0 params; slab1 = layer-1 +
# classifier params (manually DMA'd for overlap).
# ---------------------------------------------------------------------------
SLAB0_ENTRIES = (
    ("patch_w", PATCH * PATCH, EMBED),
    ("pos", NUM_PATCHES, EMBED),
    ("hmask", EMBED, HEADS),        # scaled head-membership mask (E, H)
    ("hmask_t", HEADS, EMBED),      # head -> lane broadcast mask  (H, E)
    ("wo0", EMBED, EMBED),
    ("w10", EMBED, FF),
    ("w20", FF, EMBED),
    ("patch_b", 1, EMBED),
    ("bq0", 1, EMBED), ("bk0", 1, EMBED), ("bv0", 1, EMBED), ("bo0", 1, EMBED),
    ("ln1w0", 1, EMBED), ("ln1b0", 1, EMBED),
    ("b10", 1, FF), ("b20", 1, EMBED),
    ("ln2w0", 1, EMBED), ("ln2b0", 1, EMBED),
)

SLAB1_ENTRIES = (
    ("wo1", EMBED, EMBED),
    ("w11", EMBED, FF),
    ("w21", FF, EMBED),
    ("cls_w", EMBED, LANE),
    ("pool", OUT_ROWS, LANE),       # patch-mean + row-pad matrix (8, 128)
    ("bq1", 1, EMBED), ("bk1", 1, EMBED), ("bv1", 1, EMBED), ("bo1", 1, EMBED),
    ("ln1w1", 1, EMBED), ("ln1b1", 1, EMBED),
    ("b11", 1, FF), ("b21", 1, EMBED),
    ("ln2w1", 1, EMBED), ("ln2b1", 1, EMBED),
    ("cls_b", 1, LANE),
)


def _build_layout(entries):
    layout, off = {}, 0
    for name, nrows, ncols in entries:
        layout[name] = (off, nrows, ncols)
        off += nrows
    total = -(-off // 16) * 16          # pad rows (bf16 sublane-tile friendly)
    return layout, total


LAYOUT0, ROWS0 = _build_layout(SLAB0_ENTRIES)
LAYOUT1, ROWS1 = _build_layout(SLAB1_ENTRIES)


def _pack_slab(entries, total_rows, values):
    blocks = []
    for name, nrows, ncols in entries:
        v = jnp.asarray(values[name], jnp.float32)
        if v.ndim == 1:
            v = v[None, :]
        assert v.shape == (nrows, ncols), (name, v.shape, (nrows, ncols))
        blocks.append(jnp.pad(v, ((0, 0), (0, LANE - ncols))))
    slab = jnp.concatenate(blocks, axis=0)
    if slab.shape[0] < total_rows:
        slab = jnp.pad(slab, ((0, total_rows - slab.shape[0]), (0, 0)))
    return slab.astype(jnp.bfloat16)


def pack_params(params):
    """Host-side, one-time packing into (qkv_w, slab0, slab1), all bf16."""
    vals = dict(params)

    # Derived constants (precomputed so the kernel prologue does no iota work).
    scale = 1.0 / math.sqrt(HEAD_DIM)
    lane_head = jnp.arange(EMBED)[:, None] // HEAD_DIM          # (E, 1)
    head_ids = jnp.arange(HEADS)[None, :]                        # (1, H)
    vals["hmask"] = (lane_head == head_ids).astype(jnp.float32) * scale   # (E,H)
    vals["hmask_t"] = (head_ids.T == lane_head.T).astype(jnp.float32)     # (H,E)
    # pool[r, c] = 1/P if c // P == r (supports any batch <= 8 via [:, :B*P]).
    vals["pool"] = ((jnp.arange(LANE)[None, :] // NUM_PATCHES ==
                     jnp.arange(OUT_ROWS)[:, None]).astype(jnp.float32)
                    / NUM_PATCHES)
    vals["cls_w"] = jnp.pad(jnp.asarray(params["cls_w"], jnp.float32),
                            ((0, 0), (0, LANE - CLASSES)))
    vals["cls_b"] = jnp.pad(jnp.asarray(params["cls_b"], jnp.float32),
                            ((0, LANE - CLASSES),))

    # Fused QKV weights: one (EMBED, 3*EMBED) block per layer, stacked on rows.
    qkv_w = jnp.concatenate(
        [jnp.concatenate([params[f"wq{li}"], params[f"wk{li}"], params[f"wv{li}"]],
                         axis=1) for li in range(LAYERS)],
        axis=0).astype(jnp.bfloat16)                             # (2*E, 3*E)

    slab0 = _pack_slab(SLAB0_ENTRIES, ROWS0, vals)
    slab1 = _pack_slab(SLAB1_ENTRIES, ROWS1, vals)
    return qkv_w, slab0, slab1


# ---------------------------------------------------------------------------
# Kernel
# ---------------------------------------------------------------------------
def _layernorm(x2, w, b):
    # PyTorch LayerNorm: biased variance over the last dim, eps=1e-5; f32 math.
    mu = jnp.mean(x2, axis=-1, keepdims=True)
    var = jnp.mean((x2 - mu) ** 2, axis=-1, keepdims=True)
    return (x2 - mu) * jax.lax.rsqrt(var + LN_EPS) * w + b


def _vit_kernel(x_ref, qkv_ref, slab0_ref, slab1_hbm, o_ref, slab1_vmem, sem,
                *, batch):
    f32 = jnp.float32
    bf16 = jnp.bfloat16
    B, P, E, H = batch, NUM_PATCHES, EMBED, HEADS
    BP = B * P

    # Kick off the layer-1 / classifier weight DMA immediately so it overlaps
    # with the patch-embed + layer-0 compute below.
    slab1_cp = pltpu.make_async_copy(slab1_hbm, slab1_vmem, sem)
    slab1_cp.start()

    def blk(ref, layout, name):
        r0, nr, nc = layout[name]
        return ref[r0:r0 + nr, 0:nc]

    b0 = lambda name: blk(slab0_ref, LAYOUT0, name)
    b1 = lambda name: blk(slab1_vmem, LAYOUT1, name)

    # Head masks were packed host-side (values exact in bf16); scores stay f32.
    hmask = b0("hmask").astype(f32)       # (E, H), includes 1/sqrt(head_dim)
    hmask_t = b0("hmask_t").astype(f32)   # (H, E)

    # ---- patch embedding + positional encoding (2-D residual stream) ----
    x = x_ref[...].astype(bf16)                                       # (BP, 64)
    h = jnp.dot(x, b0("patch_w"), preferred_element_type=f32) + b0("patch_b")
    h = (h.reshape(B, P, E) + b0("pos")[None].astype(f32)).reshape(BP, E)

    # ---- one post-norm encoder layer (ReLU FFN, eval mode) ----
    def encoder_layer(h, li, bx):
        hb = h.astype(bf16)
        wqkv = qkv_ref[li * E:(li + 1) * E, :]                        # (E, 3E)
        qkv = jnp.dot(hb, wqkv, preferred_element_type=f32)           # (BP, 3E)
        q = qkv[:, 0:E] + bx(f"bq{li}")
        k = qkv[:, E:2 * E] + bx(f"bk{li}")
        v = qkv[:, 2 * E:3 * E] + bx(f"bv{li}")
        q3 = q.reshape(B, P, E)
        k3 = k.reshape(B, P, E)
        v3 = v.reshape(B, P, E)

        # Attention over the batch axis (the seq dim for batch_first=False),
        # vectorized over all heads:
        #   s[b,c,p,h] = sum_{e in head h} q[b,p,e] * k[c,p,e] / sqrt(D)
        prod = q3[:, None, :, :] * k3[None, :, :, :]                  # (B,B,P,E)
        s = jnp.dot(prod.reshape(B * B * P, E), hmask,
                    preferred_element_type=f32)                       # f32 scores
        s4 = s.reshape(B, B, P, H)
        m = jnp.max(s4, axis=1, keepdims=True)
        e_exp = jnp.exp(s4 - m)
        a = e_exp / jnp.sum(e_exp, axis=1, keepdims=True)             # exact softmax
        # Broadcast head weights back to their lanes, then mix V.
        a_e = jnp.dot(a.reshape(B * B * P, H), hmask_t,
                      preferred_element_type=f32).reshape(B, B, P, E)
        attn3 = jnp.sum(a_e * v3[None, :, :, :], axis=1)              # (B,P,E)
        attn = jnp.dot(attn3.reshape(BP, E).astype(bf16), bx(f"wo{li}"),
                       preferred_element_type=f32) + bx(f"bo{li}")

        h1 = _layernorm(h + attn, bx(f"ln1w{li}"), bx(f"ln1b{li}"))
        ff = jnp.dot(h1.astype(bf16), bx(f"w1{li}"),
                     preferred_element_type=f32) + bx(f"b1{li}")
        ff = jnp.maximum(ff, 0.0)
        ff = jnp.dot(ff.astype(bf16), bx(f"w2{li}"),
                     preferred_element_type=f32) + bx(f"b2{li}")
        return _layernorm(h1 + ff, bx(f"ln2w{li}"), bx(f"ln2b{li}"))

    h = encoder_layer(h, 0, b0)

    slab1_cp.wait()        # layer-1 + classifier weights now resident in VMEM

    h = encoder_layer(h, 1, b1)

    # ---- mean pool over patches + classifier (8x128 dense, unmasked store) ----
    pool = b1("pool")[:, 0:BP].astype(f32)                            # (8, BP)
    pooled = jnp.dot(pool, h, preferred_element_type=f32)             # (8, E)
    logits = jnp.dot(pooled.astype(bf16), b1("cls_w"),
                     preferred_element_type=f32) + b1("cls_b")        # (8, 128)
    o_ref[...] = logits


# ---------------------------------------------------------------------------
# Wrapper
# ---------------------------------------------------------------------------
def simple_vit_forward(x, packed):
    qkv_w, slab0, slab1 = packed
    B, C, H, W = x.shape
    assert C == 1 and H == IMAGE_SIZE and W == IMAGE_SIZE and B <= MAX_BATCH
    nh, nw = H // PATCH, W // PATCH

    # Replicate x.unfold(2,p,p).unfold(3,p,p).contiguous()
    #            .view(B,1,p,p,-1).permute(0,4,1,2,3).contiguous().view(B,-1,p*p)
    xb = x.reshape(B, C, nh, PATCH, nw, PATCH).transpose(0, 1, 2, 4, 3, 5)
    flat = xb.reshape(B, C * PATCH * PATCH, nh * nw)
    patches = flat.transpose(0, 2, 1).reshape(B * NUM_PATCHES, PATCH * PATCH)

    vmem = pl.BlockSpec(memory_space=pltpu.MemorySpace.VMEM)
    out = pl.pallas_call(
        functools.partial(_vit_kernel, batch=B),
        out_shape=jax.ShapeDtypeStruct((OUT_ROWS, LANE), jnp.float32),
        in_specs=[vmem, vmem, vmem, pl.BlockSpec(memory_space=pl.ANY)],
        out_specs=vmem,
        scratch_shapes=[pltpu.VMEM((ROWS1, LANE), jnp.bfloat16),
                        pltpu.SemaphoreType.DMA(())],
    )(patches, qkv_w, slab0, slab1)
    return out[:B, :CLASSES]


# ---------------------------------------------------------------------------
# Init + demo
# ---------------------------------------------------------------------------
def init_params(key):
    def rnd(k, shape, scale=0.02):
        return scale * jax.random.normal(k, shape, dtype=jnp.float32)

    keys = iter(jax.random.split(key, 64))
    p = {
        "patch_w": rnd(next(keys), (PATCH * PATCH, EMBED)),
        "patch_b": rnd(next(keys), (EMBED,)),
        "pos": rnd(next(keys), (NUM_PATCHES, EMBED)),
        "cls_w": rnd(next(keys), (EMBED, CLASSES)),
        "cls_b": rnd(next(keys), (CLASSES,)),
    }
    for li in range(LAYERS):
        p[f"wq{li}"] = rnd(next(keys), (EMBED, EMBED))
        p[f"wk{li}"] = rnd(next(keys), (EMBED, EMBED))
        p[f"wv{li}"] = rnd(next(keys), (EMBED, EMBED))
        p[f"bq{li}"] = rnd(next(keys), (EMBED,))
        p[f"bk{li}"] = rnd(next(keys), (EMBED,))
        p[f"bv{li}"] = rnd(next(keys), (EMBED,))
        p[f"wo{li}"] = rnd(next(keys), (EMBED, EMBED))
        p[f"bo{li}"] = rnd(next(keys), (EMBED,))
        p[f"ln1w{li}"] = jnp.ones((EMBED,), jnp.float32)
        p[f"ln1b{li}"] = jnp.zeros((EMBED,), jnp.float32)
        p[f"w1{li}"] = rnd(next(keys), (EMBED, FF))
        p[f"b1{li}"] = rnd(next(keys), (FF,))
        p[f"w2{li}"] = rnd(next(keys), (FF, EMBED))
        p[f"b2{li}"] = rnd(next(keys), (EMBED,))
        p[f"ln2w{li}"] = jnp.ones((EMBED,), jnp.float32)
        p[f"ln2b{li}"] = jnp.zeros((EMBED,), jnp.float32)
    return p


if __name__ == "__main__":
    key = jax.random.PRNGKey(0)
    pkey, xkey = jax.random.split(key)
    params = init_params(pkey)
    x = jax.random.normal(xkey, (2, 1, IMAGE_SIZE, IMAGE_SIZE), dtype=jnp.float32)

    packed = pack_params(params)        # one-time host-side packing (bf16)
    logits = simple_vit_forward(x, packed)
    jax.block_until_ready(logits)

    assert logits.shape == (2, CLASSES)
    assert bool(jnp.all(jnp.isfinite(logits)))
    print("KERNEL_OK")
</pallas_src>

<mosaic_0001>
module attributes {stable_mosaic.version = 11 : i64} {
  func.func @_vit_kernel(%arg0: memref<32x64xf32, #tpu.memory_space<vmem>>, %arg1: memref<128x192xbf16, #tpu.memory_space<vmem>>, %arg2: memref<416x128xbf16, #tpu.memory_space<vmem>>, %arg3: memref<352x128xbf16, #tpu.memory_space<any>>, %arg4: memref<8x128xf32, #tpu.memory_space<vmem>>, %arg5: memref<352x128xbf16, #tpu.memory_space<vmem>>, %arg6: memref<!tpu.dma_semaphore, #tpu.memory_space<semaphore_mem>>) attributes {dimension_semantics = [], scalar_prefetch = 0 : i64, scratch_operands = 2 : i64, tpu.core_type = #tpu.core_type<tc>} {
    tpu.enqueue_dma source(%arg3 : memref<352x128xbf16, #tpu.memory_space<any>>) target(%arg5 : memref<352x128xbf16, #tpu.memory_space<vmem>>) target_semaphore(%arg6 : memref<!tpu.dma_semaphore, #tpu.memory_space<semaphore_mem>>)
    %c80 = arith.constant 80 : index
    %c0 = arith.constant 0 : index
    %0 = vector.load %arg2[%c80, %c0] : memref<416x128xbf16, #tpu.memory_space<vmem>>, vector<64x4xbf16>
    %1 = arith.extf %0 : vector<64x4xbf16> to vector<64x4xf32>
    %c144 = arith.constant 144 : index
    %c0_0 = arith.constant 0 : index
    %2 = vector.load %arg2[%c144, %c0_0] : memref<416x128xbf16, #tpu.memory_space<vmem>>, vector<4x64xbf16>
    %3 = arith.extf %2 : vector<4x64xbf16> to vector<4x64xf32>
    %c0_1 = arith.constant 0 : index
    %c0_2 = arith.constant 0 : index
    %4 = vector.load %arg0[%c0_1, %c0_2] : memref<32x64xf32, #tpu.memory_space<vmem>>, vector<32x64xf32>
    %5 = arith.truncf %4 : vector<32x64xf32> to vector<32x64xbf16>
    %c0_3 = arith.constant 0 : index
    %c0_4 = arith.constant 0 : index
    %6 = vector.load %arg2[%c0_3, %c0_4] : memref<416x128xbf16, #tpu.memory_space<vmem>>, vector<64x64xbf16>
    %cst = arith.constant dense<0.000000e+00> : vector<32x64xf32>
    %7 = tpu.matmul %5, %6, %cst {dimension_numbers = #tpu.dot_dimension_numbers<[1], [0], [0], [1], [0, 0, 1, 1], [], []>} : vector<32x64xbf16>, vector<64x64xbf16>, vector<32x64xf32> -> vector<32x64xf32>
    %c404 = arith.constant 404 : index
    %c0_5 = arith.constant 0 : index
    %8 = vector.load %arg2[%c404, %c0_5] : memref<416x128xbf16, #tpu.memory_space<vmem>>, vector<1x64xbf16>
    %9 = arith.extf %8 : vector<1x64xbf16> to vector<1x64xf32>
    %10 = vector.broadcast %9 : vector<1x64xf32> to vector<32x64xf32>
    %11 = arith.addf %7, %10 : vector<32x64xf32>
    %12 = vector.shape_cast %11 : vector<32x64xf32> to vector<2x16x64xf32>
    %c64 = arith.constant 64 : index
    %c0_6 = arith.constant 0 : index
    %13 = vector.load %arg2[%c64, %c0_6] : memref<416x128xbf16, #tpu.memory_space<vmem>>, vector<16x64xbf16>
    %14 = vector.shape_cast %13 : vector<16x64xbf16> to vector<1x16x64xbf16>
    %15 = arith.extf %14 : vector<1x16x64xbf16> to vector<1x16x64xf32>
    %16 = vector.broadcast %15 : vector<1x16x64xf32> to vector<2x16x64xf32>
    %17 = arith.addf %12, %16 : vector<2x16x64xf32>
    %18 = vector.shape_cast %17 : vector<2x16x64xf32> to vector<32x64xf32>
    %19 = arith.truncf %18 : vector<32x64xf32> to vector<32x64xbf16>
    %c0_7 = arith.constant 0 : index
    %c0_8 = arith.constant 0 : index
    %20 = vector.load %arg1[%c0_7, %c0_8] : memref<128x192xbf16, #tpu.memory_space<vmem>>, vector<64x192xbf16>
    %cst_9 = arith.constant dense<0.000000e+00> : vector<32x192xf32>
    %21 = tpu.matmul %19, %20, %cst_9 {dimension_numbers = #tpu.dot_dimension_numbers<[1], [0], [0], [1], [0, 0, 1, 1], [], []>} : vector<32x64xbf16>, vector<64x192xbf16>, vector<32x192xf32> -> vector<32x192xf32>
    %22 = vector.extract_strided_slice %21 {offsets = [0, 0], sizes = [32, 64], strides = [1, 1]} : vector<32x192xf32> to vector<32x64xf32>
    %c405 = arith.constant 405 : index
    %c0_10 = arith.constant 0 : index
    %23 = vector.load %arg2[%c405, %c0_10] : memref<416x128xbf16, #tpu.memory_space<vmem>>, vector<1x64xbf16>
    %24 = arith.extf %23 : vector<1x64xbf16> to vector<1x64xf32>
    %25 = vector.broadcast %24 : vector<1x64xf32> to vector<32x64xf32>
    %26 = arith.addf %22, %25 : vector<32x64xf32>
    %27 = vector.extract_strided_slice %21 {offsets = [0, 64], sizes = [32, 64], strides = [1, 1]} : vector<32x192xf32> to vector<32x64xf32>
    %c406 = arith.constant 406 : index
    %c0_11 = arith.constant 0 : index
    %28 = vector.load %arg2[%c406, %c0_11] : memref<416x128xbf16, #tpu.memory_space<vmem>>, vector<1x64xbf16>
    %29 = arith.extf %28 : vector<1x64xbf16> to vector<1x64xf32>
    %30 = vector.broadcast %29 : vector<1x64xf32> to vector<32x64xf32>
    %31 = arith.addf %27, %30 : vector<32x64xf32>
    %32 = vector.extract_strided_slice %21 {offsets = [0, 128], sizes = [32, 64], strides = [1, 1]} : vector<32x192xf32> to vector<32x64xf32>
    %c407 = arith.constant 407 : index
    %c0_12 = arith.constant 0 : index
    %33 = vector.load %arg2[%c407, %c0_12] : memref<416x128xbf16, #tpu.memory_space<vmem>>, vector<1x64xbf16>
    %34 = arith.extf %33 : vector<1x64xbf16> to vector<1x64xf32>
    %35 = vector.broadcast %34 : vector<1x64xf32> to vector<32x64xf32>
    %36 = arith.addf %32, %35 : vector<32x64xf32>
    %37 = vector.shape_cast %26 : vector<32x64xf32> to vector<2x16x64xf32>
    %38 = vector.shape_cast %31 : vector<32x64xf32> to vector<2x16x64xf32>
    %39 = vector.shape_cast %36 : vector<32x64xf32> to vector<2x16x64xf32>
    %40 = vector.shape_cast %37 : vector<2x16x64xf32> to vector<2x1x16x64xf32>
    %41 = vector.shape_cast %38 : vector<2x16x64xf32> to vector<1x2x16x64xf32>
    %42 = vector.broadcast %40 : vector<2x1x16x64xf32> to vector<2x2x16x64xf32>
    %43 = vector.broadcast %41 : vector<1x2x16x64xf32> to vector<2x2x16x64xf32>
    %44 = arith.mulf %42, %43 : vector<2x2x16x64xf32>
    %45 = vector.shape_cast %44 : vector<2x2x16x64xf32> to vector<64x64xf32>
    %cst_13 = arith.constant dense<0.000000e+00> : vector<64x4xf32>
    %46 = tpu.matmul %45, %1, %cst_13 {dimension_numbers = #tpu.dot_dimension_numbers<[1], [0], [0], [1], [0, 0, 1, 1], [], []>} : vector<64x64xf32>, vector<64x4xf32>, vector<64x4xf32> -> vector<64x4xf32>
    %47 = vector.shape_cast %46 : vector<64x4xf32> to vector<2x2x16x4xf32>
    %cst_14 = arith.constant dense<0xFF800000> : vector<2x16x4xf32>
    %48 = vector.multi_reduction <maximumf>, %47, %cst_14 [1] : vector<2x2x16x4xf32> to vector<2x16x4xf32>
    %49 = vector.shape_cast %48 : vector<2x16x4xf32> to vector<2x1x16x4xf32>
    %50 = vector.broadcast %49 : vector<2x1x16x4xf32> to vector<2x2x16x4xf32>
    %51 = arith.subf %47, %50 : vector<2x2x16x4xf32>
    %52 = math.exp %51 : vector<2x2x16x4xf32>
    %cst_15 = arith.constant dense<0.000000e+00> : vector<2x16x4xf32>
    %53 = vector.multi_reduction <add>, %52, %cst_15 [1] : vector<2x2x16x4xf32> to vector<2x16x4xf32>
    %54 = vector.shape_cast %53 : vector<2x16x4xf32> to vector<2x1x16x4xf32>
    %55 = vector.broadcast %54 : vector<2x1x16x4xf32> to vector<2x2x16x4xf32>
    %56 = arith.divf %52, %55 : vector<2x2x16x4xf32>
    %57 = vector.shape_cast %56 : vector<2x2x16x4xf32> to vector<64x4xf32>
    %cst_16 = arith.constant dense<0.000000e+00> : vector<64x64xf32>
    %58 = tpu.matmul %57, %3, %cst_16 {dimension_numbers = #tpu.dot_dimension_numbers<[1], [0], [0], [1], [0, 0, 1, 1], [], []>} : vector<64x4xf32>, vector<4x64xf32>, vector<64x64xf32> -> vector<64x64xf32>
    %59 = vector.shape_cast %58 : vector<64x64xf32> to vector<2x2x16x64xf32>
    %60 = vector.shape_cast %39 : vector<2x16x64xf32> to vector<1x2x16x64xf32>
    %61 = vector.broadcast %60 : vector<1x2x16x64xf32> to vector<2x2x16x64xf32>
    %62 = arith.mulf %59, %61 : vector<2x2x16x64xf32>
    %cst_17 = arith.constant dense<0.000000e+00> : vector<2x16x64xf32>
    %63 = vector.multi_reduction <add>, %62, %cst_17 [1] : vector<2x2x16x64xf32> to vector<2x16x64xf32>
    %64 = vector.shape_cast %63 : vector<2x16x64xf32> to vector<32x64xf32>
    %65 = arith.truncf %64 : vector<32x64xf32> to vector<32x64xbf16>
    %c148 = arith.constant 148 : index
    %c0_18 = arith.constant 0 : index
    %66 = vector.load %arg2[%c148, %c0_18] : memref<416x128xbf16, #tpu.memory_space<vmem>>, vector<64x64xbf16>
    %cst_19 = arith.constant dense<0.000000e+00> : vector<32x64xf32>
    %67 = tpu.matmul %65, %66, %cst_19 {dimension_numbers = #tpu.dot_dimension_numbers<[1], [0], [0], [1], [0, 0, 1, 1], [], []>} : vector<32x64xbf16>, vector<64x64xbf16>, vector<32x64xf32> -> vector<32x64xf32>
    %c408 = arith.constant 408 : index
    %c0_20 = arith.constant 0 : index
    %68 = vector.load %arg2[%c408, %c0_20] : memref<416x128xbf16, #tpu.memory_space<vmem>>, vector<1x64xbf16>
    %69 = arith.extf %68 : vector<1x64xbf16> to vector<1x64xf32>
    %70 = vector.broadcast %69 : vector<1x64xf32> to vector<32x64xf32>
    %71 = arith.addf %67, %70 : vector<32x64xf32>
    %72 = arith.addf %18, %71 : vector<32x64xf32>
    %c409 = arith.constant 409 : index
    %c0_21 = arith.constant 0 : index
    %73 = vector.load %arg2[%c409, %c0_21] : memref<416x128xbf16, #tpu.memory_space<vmem>>, vector<1x64xbf16>
    %c410 = arith.constant 410 : index
    %c0_22 = arith.constant 0 : index
    %74 = vector.load %arg2[%c410, %c0_22] : memref<416x128xbf16, #tpu.memory_space<vmem>>, vector<1x64xbf16>
    %cst_23 = arith.constant dense<0.000000e+00> : vector<32xf32>
    %75 = vector.multi_reduction <add>, %72, %cst_23 [1] : vector<32x64xf32> to vector<32xf32>
    %76 = vector.shape_cast %75 : vector<32xf32> to vector<32x1xf32>
    %cst_24 = arith.constant 6.400000e+01 : f32
    %77 = vector.broadcast %cst_24 : f32 to vector<32x1xf32>
    %78 = arith.divf %76, %77 : vector<32x1xf32>
    %79 = vector.broadcast %78 : vector<32x1xf32> to vector<32x64xf32>
    %80 = arith.subf %72, %79 : vector<32x64xf32>
    %81 = arith.mulf %80, %80 : vector<32x64xf32>
    %cst_25 = arith.constant dense<0.000000e+00> : vector<32xf32>
    %82 = vector.multi_reduction <add>, %81, %cst_25 [1] : vector<32x64xf32> to vector<32xf32>
    %83 = vector.shape_cast %82 : vector<32xf32> to vector<32x1xf32>
    %cst_26 = arith.constant 6.400000e+01 : f32
    %84 = vector.broadcast %cst_26 : f32 to vector<32x1xf32>
    %85 = arith.divf %83, %84 : vector<32x1xf32>
    %86 = vector.broadcast %78 : vector<32x1xf32> to vector<32x64xf32>
    %87 = arith.subf %72, %86 : vector<32x64xf32>
    %cst_27 = arith.constant 9.99999974E-6 : f32
    %88 = vector.broadcast %cst_27 : f32 to vector<32x1xf32>
    %89 = arith.addf %85, %88 : vector<32x1xf32>
    %90 = math.rsqrt %89 : vector<32x1xf32>
    %91 = vector.broadcast %90 : vector<32x1xf32> to vector<32x64xf32>
    %92 = arith.mulf %87, %91 : vector<32x64xf32>
    %93 = arith.extf %73 : vector<1x64xbf16> to vector<1x64xf32>
    %94 = vector.broadcast %93 : vector<1x64xf32> to vector<32x64xf32>
    %95 = arith.mulf %92, %94 : vector<32x64xf32>
    %96 = arith.extf %74 : vector<1x64xbf16> to vector<1x64xf32>
    %97 = vector.broadcast %96 : vector<1x64xf32> to vector<32x64xf32>
    %98 = arith.addf %95, %97 : vector<32x64xf32>
    %99 = arith.truncf %98 : vector<32x64xf32> to vector<32x64xbf16>
    %c212 = arith.constant 212 : index
    %c0_28 = arith.constant 0 : index
    %100 = vector.load %arg2[%c212, %c0_28] : memref<416x128xbf16, #tpu.memory_space<vmem>>, vector<64x128xbf16>
    %cst_29 = arith.constant dense<0.000000e+00> : vector<32x128xf32>
    %101 = tpu.matmul %99, %100, %cst_29 {dimension_numbers = #tpu.dot_dimension_numbers<[1], [0], [0], [1], [0, 0, 1, 1], [], []>} : vector<32x64xbf16>, vector<64x128xbf16>, vector<32x128xf32> -> vector<32x128xf32>
    %c411 = arith.constant 411 : index
    %c0_30 = arith.constant 0 : index
    %102 = vector.load %arg2[%c411, %c0_30] : memref<416x128xbf16, #tpu.memory_space<vmem>>, vector<1x128xbf16>
    %103 = arith.extf %102 : vector<1x128xbf16> to vector<1x128xf32>
    %104 = vector.broadcast %103 : vector<1x128xf32> to vector<32x128xf32>
    %105 = arith.addf %101, %104 : vector<32x128xf32>
    %cst_31 = arith.constant 0.000000e+00 : f32
    %106 = vector.broadcast %cst_31 : f32 to vector<32x128xf32>
    %107 = arith.maximumf %105, %106 : vector<32x128xf32>
    %108 = arith.truncf %107 : vector<32x128xf32> to vector<32x128xbf16>
    %c276 = arith.constant 276 : index
    %c0_32 = arith.constant 0 : index
    %109 = vector.load %arg2[%c276, %c0_32] : memref<416x128xbf16, #tpu.memory_space<vmem>>, vector<128x64xbf16>
    %cst_33 = arith.constant dense<0.000000e+00> : vector<32x64xf32>
    %110 = tpu.matmul %108, %109, %cst_33 {dimension_numbers = #tpu.dot_dimension_numbers<[1], [0], [0], [1], [0, 0, 1, 1], [], []>} : vector<32x128xbf16>, vector<128x64xbf16>, vector<32x64xf32> -> vector<32x64xf32>
    %c412 = arith.constant 412 : index
    %c0_34 = arith.constant 0 : index
    %111 = vector.load %arg2[%c412, %c0_34] : memref<416x128xbf16, #tpu.memory_space<vmem>>, vector<1x64xbf16>
    %112 = arith.extf %111 : vector<1x64xbf16> to vector<1x64xf32>
    %113 = vector.broadcast %112 : vector<1x64xf32> to vector<32x64xf32>
    %114 = arith.addf %110, %113 : vector<32x64xf32>
    %115 = arith.addf %98, %114 : vector<32x64xf32>
    %c413 = arith.constant 413 : index
    %c0_35 = arith.constant 0 : index
    %116 = vector.load %arg2[%c413, %c0_35] : memref<416x128xbf16, #tpu.memory_space<vmem>>, vector<1x64xbf16>
    %c414 = arith.constant 414 : index
    %c0_36 = arith.constant 0 : index
    %117 = vector.load %arg2[%c414, %c0_36] : memref<416x128xbf16, #tpu.memory_space<vmem>>, vector<1x64xbf16>
    %cst_37 = arith.constant dense<0.000000e+00> : vector<32xf32>
    %118 = vector.multi_reduction <add>, %115, %cst_37 [1] : vector<32x64xf32> to vector<32xf32>
    %119 = vector.shape_cast %118 : vector<32xf32> to vector<32x1xf32>
    %cst_38 = arith.constant 6.400000e+01 : f32
    %120 = vector.broadcast %cst_38 : f32 to vector<32x1xf32>
    %121 = arith.divf %119, %120 : vector<32x1xf32>
    %122 = vector.broadcast %121 : vector<32x1xf32> to vector<32x64xf32>
    %123 = arith.subf %115, %122 : vector<32x64xf32>
    %124 = arith.mulf %123, %123 : vector<32x64xf32>
    %cst_39 = arith.constant dense<0.000000e+00> : vector<32xf32>
    %125 = vector.multi_reduction <add>, %124, %cst_39 [1] : vector<32x64xf32> to vector<32xf32>
    %126 = vector.shape_cast %125 : vector<32xf32> to vector<32x1xf32>
    %cst_40 = arith.constant 6.400000e+01 : f32
    %127 = vector.broadcast %cst_40 : f32 to vector<32x1xf32>
    %128 = arith.divf %126, %127 : vector<32x1xf32>
    %129 = vector.broadcast %121 : vector<32x1xf32> to vector<32x64xf32>
    %130 = arith.subf %115, %129 : vector<32x64xf32>
    %cst_41 = arith.constant 9.99999974E-6 : f32
    %131 = vector.broadcast %cst_41 : f32 to vector<32x1xf32>
    %132 = arith.addf %128, %131 : vector<32x1xf32>
    %133 = math.rsqrt %132 : vector<32x1xf32>
    %134 = vector.broadcast %133 : vector<32x1xf32> to vector<32x64xf32>
    %135 = arith.mulf %130, %134 : vector<32x64xf32>
    %136 = arith.extf %116 : vector<1x64xbf16> to vector<1x64xf32>
    %137 = vector.broadcast %136 : vector<1x64xf32> to vector<32x64xf32>
    %138 = arith.mulf %135, %137 : vector<32x64xf32>
    %139 = arith.extf %117 : vector<1x64xbf16> to vector<1x64xf32>
    %140 = vector.broadcast %139 : vector<1x64xf32> to vector<32x64xf32>
    %141 = arith.addf %138, %140 : vector<32x64xf32>
    tpu.wait_dma2 semaphore(%arg6 : memref<!tpu.dma_semaphore, #tpu.memory_space<semaphore_mem>>) src(%arg3 : memref<352x128xbf16, #tpu.memory_space<any>>) dst(%arg5 : memref<352x128xbf16, #tpu.memory_space<vmem>>)
    %142 = arith.truncf %141 : vector<32x64xf32> to vector<32x64xbf16>
    %c64_42 = arith.constant 64 : index
    %c0_43 = arith.constant 0 : index
    %143 = vector.load %arg1[%c64_42, %c0_43] : memref<128x192xbf16, #tpu.memory_space<vmem>>, vector<64x192xbf16>
    %cst_44 = arith.constant dense<0.000000e+00> : vector<32x192xf32>
    %144 = tpu.matmul %142, %143, %cst_44 {dimension_numbers = #tpu.dot_dimension_numbers<[1], [0], [0], [1], [0, 0, 1, 1], [], []>} : vector<32x64xbf16>, vector<64x192xbf16>, vector<32x192xf32> -> vector<32x192xf32>
    %145 = vector.extract_strided_slice %144 {offsets = [0, 0], sizes = [32, 64], strides = [1, 1]} : vector<32x192xf32> to vector<32x64xf32>
    %c328 = arith.constant 328 : index
    %c0_45 = arith.constant 0 : index
    %146 = vector.load %arg5[%c328, %c0_45] : memref<352x128xbf16, #tpu.memory_space<vmem>>, vector<1x64xbf16>
    %147 = arith.extf %146 : vector<1x64xbf16> to vector<1x64xf32>
    %148 = vector.broadcast %147 : vector<1x64xf32> to vector<32x64xf32>
    %149 = arith.addf %145, %148 : vector<32x64xf32>
    %150 = vector.extract_strided_slice %144 {offsets = [0, 64], sizes = [32, 64], strides = [1, 1]} : vector<32x192xf32> to vector<32x64xf32>
    %c329 = arith.constant 329 : index
    %c0_46 = arith.constant 0 : index
    %151 = vector.load %arg5[%c329, %c0_46] : memref<352x128xbf16, #tpu.memory_space<vmem>>, vector<1x64xbf16>
    %152 = arith.extf %151 : vector<1x64xbf16> to vector<1x64xf32>
    %153 = vector.broadcast %152 : vector<1x64xf32> to vector<32x64xf32>
    %154 = arith.addf %150, %153 : vector<32x64xf32>
    %155 = vector.extract_strided_slice %144 {offsets = [0, 128], sizes = [32, 64], strides = [1, 1]} : vector<32x192xf32> to vector<32x64xf32>
    %c330 = arith.constant 330 : index
    %c0_47 = arith.constant 0 : index
    %156 = vector.load %arg5[%c330, %c0_47] : memref<352x128xbf16, #tpu.memory_space<vmem>>, vector<1x64xbf16>
    %157 = arith.extf %156 : vector<1x64xbf16> to vector<1x64xf32>
    %158 = vector.broadcast %157 : vector<1x64xf32> to vector<32x64xf32>
    %159 = arith.addf %155, %158 : vector<32x64xf32>
    %160 = vector.shape_cast %149 : vector<32x64xf32> to vector<2x16x64xf32>
    %161 = vector.shape_cast %154 : vector<32x64xf32> to vector<2x16x64xf32>
    %162 = vector.shape_cast %159 : vector<32x64xf32> to vector<2x16x64xf32>
    %163 = vector.shape_cast %160 : vector<2x16x64xf32> to vector<2x1x16x64xf32>
    %164 = vector.shape_cast %161 : vector<2x16x64xf32> to vector<1x2x16x64xf32>
    %165 = vector.broadcast %163 : vector<2x1x16x64xf32> to vector<2x2x16x64xf32>
    %166 = vector.broadcast %164 : vector<1x2x16x64xf32> to vector<2x2x16x64xf32>
    %167 = arith.mulf %165, %166 : vector<2x2x16x64xf32>
    %168 = vector.shape_cast %167 : vector<2x2x16x64xf32> to vector<64x64xf32>
    %cst_48 = arith.constant dense<0.000000e+00> : vector<64x4xf32>
    %169 = tpu.matmul %168, %1, %cst_48 {dimension_numbers = #tpu.dot_dimension_numbers<[1], [0], [0], [1], [0, 0, 1, 1], [], []>} : vector<64x64xf32>, vector<64x4xf32>, vector<64x4xf32> -> vector<64x4xf32>
    %170 = vector.shape_cast %169 : vector<64x4xf32> to vector<2x2x16x4xf32>
    %cst_49 = arith.constant dense<0xFF800000> : vector<2x16x4xf32>
    %171 = vector.multi_reduction <maximumf>, %170, %cst_49 [1] : vector<2x2x16x4xf32> to vector<2x16x4xf32>
    %172 = vector.shape_cast %171 : vector<2x16x4xf32> to vector<2x1x16x4xf32>
    %173 = vector.broadcast %172 : vector<2x1x16x4xf32> to vector<2x2x16x4xf32>
    %174 = arith.subf %170, %173 : vector<2x2x16x4xf32>
    %175 = math.exp %174 : vector<2x2x16x4xf32>
    %cst_50 = arith.constant dense<0.000000e+00> : vector<2x16x4xf32>
    %176 = vector.multi_reduction <add>, %175, %cst_50 [1] : vector<2x2x16x4xf32> to vector<2x16x4xf32>
    %177 = vector.shape_cast %176 : vector<2x16x4xf32> to vector<2x1x16x4xf32>
    %178 = vector.broadcast %177 : vector<2x1x16x4xf32> to vector<2x2x16x4xf32>
    %179 = arith.divf %175, %178 : vector<2x2x16x4xf32>
    %180 = vector.shape_cast %179 : vector<2x2x16x4xf32> to vector<64x4xf32>
    %cst_51 = arith.constant dense<0.000000e+00> : vector<64x64xf32>
    %181 = tpu.matmul %180, %3, %cst_51 {dimension_numbers = #tpu.dot_dimension_numbers<[1], [0], [0], [1], [0, 0, 1, 1], [], []>} : vector<64x4xf32>, vector<4x64xf32>, vector<64x64xf32> -> vector<64x64xf32>
    %182 = vector.shape_cast %181 : vector<64x64xf32> to vector<2x2x16x64xf32>
    %183 = vector.shape_cast %162 : vector<2x16x64xf32> to vector<1x2x16x64xf32>
    %184 = vector.broadcast %183 : vector<1x2x16x64xf32> to vector<2x2x16x64xf32>
    %185 = arith.mulf %182, %184 : vector<2x2x16x64xf32>
    %cst_52 = arith.constant dense<0.000000e+00> : vector<2x16x64xf32>
    %186 = vector.multi_reduction <add>, %185, %cst_52 [1] : vector<2x2x16x64xf32> to vector<2x16x64xf32>
    %187 = vector.shape_cast %186 : vector<2x16x64xf32> to vector<32x64xf32>
    %188 = arith.truncf %187 : vector<32x64xf32> to vector<32x64xbf16>
    %c0_53 = arith.constant 0 : index
    %c0_54 = arith.constant 0 : index
    %189 = vector.load %arg5[%c0_53, %c0_54] : memref<352x128xbf16, #tpu.memory_space<vmem>>, vector<64x64xbf16>
    %cst_55 = arith.constant dense<0.000000e+00> : vector<32x64xf32>
    %190 = tpu.matmul %188, %189, %cst_55 {dimension_numbers = #tpu.dot_dimension_numbers<[1], [0], [0], [1], [0, 0, 1, 1], [], []>} : vector<32x64xbf16>, vector<64x64xbf16>, vector<32x64xf32> -> vector<32x64xf32>
    %c331 = arith.constant 331 : index
    %c0_56 = arith.constant 0 : index
    %191 = vector.load %arg5[%c331, %c0_56] : memref<352x128xbf16, #tpu.memory_space<vmem>>, vector<1x64xbf16>
    %192 = arith.extf %191 : vector<1x64xbf16> to vector<1x64xf32>
    %193 = vector.broadcast %192 : vector<1x64xf32> to vector<32x64xf32>
    %194 = arith.addf %190, %193 : vector<32x64xf32>
    %195 = arith.addf %141, %194 : vector<32x64xf32>
    %c332 = arith.constant 332 : index
    %c0_57 = arith.constant 0 : index
    %196 = vector.load %arg5[%c332, %c0_57] : memref<352x128xbf16, #tpu.memory_space<vmem>>, vector<1x64xbf16>
    %c333 = arith.constant 333 : index
    %c0_58 = arith.constant 0 : index
    %197 = vector.load %arg5[%c333, %c0_58] : memref<352x128xbf16, #tpu.memory_space<vmem>>, vector<1x64xbf16>
    %cst_59 = arith.constant dense<0.000000e+00> : vector<32xf32>
    %198 = vector.multi_reduction <add>, %195, %cst_59 [1] : vector<32x64xf32> to vector<32xf32>
    %199 = vector.shape_cast %198 : vector<32xf32> to vector<32x1xf32>
    %cst_60 = arith.constant 6.400000e+01 : f32
    %200 = vector.broadcast %cst_60 : f32 to vector<32x1xf32>
    %201 = arith.divf %199, %200 : vector<32x1xf32>
    %202 = vector.broadcast %201 : vector<32x1xf32> to vector<32x64xf32>
    %203 = arith.subf %195, %202 : vector<32x64xf32>
    %204 = arith.mulf %203, %203 : vector<32x64xf32>
    %cst_61 = arith.constant dense<0.000000e+00> : vector<32xf32>
    %205 = vector.multi_reduction <add>, %204, %cst_61 [1] : vector<32x64xf32> to vector<32xf32>
    %206 = vector.shape_cast %205 : vector<32xf32> to vector<32x1xf32>
    %cst_62 = arith.constant 6.400000e+01 : f32
    %207 = vector.broadcast %cst_62 : f32 to vector<32x1xf32>
    %208 = arith.divf %206, %207 : vector<32x1xf32>
    %209 = vector.broadcast %201 : vector<32x1xf32> to vector<32x64xf32>
    %210 = arith.subf %195, %209 : vector<32x64xf32>
    %cst_63 = arith.constant 9.99999974E-6 : f32
    %211 = vector.broadcast %cst_63 : f32 to vector<32x1xf32>
    %212 = arith.addf %208, %211 : vector<32x1xf32>
    %213 = math.rsqrt %212 : vector<32x1xf32>
    %214 = vector.broadcast %213 : vector<32x1xf32> to vector<32x64xf32>
    %215 = arith.mulf %210, %214 : vector<32x64xf32>
    %216 = arith.extf %196 : vector<1x64xbf16> to vector<1x64xf32>
    %217 = vector.broadcast %216 : vector<1x64xf32> to vector<32x64xf32>
    %218 = arith.mulf %215, %217 : vector<32x64xf32>
    %219 = arith.extf %197 : vector<1x64xbf16> to vector<1x64xf32>
    %220 = vector.broadcast %219 : vector<1x64xf32> to vector<32x64xf32>
    %221 = arith.addf %218, %220 : vector<32x64xf32>
    %222 = arith.truncf %221 : vector<32x64xf32> to vector<32x64xbf16>
    %c64_64 = arith.constant 64 : index
    %c0_65 = arith.constant 0 : index
    %223 = vector.load %arg5[%c64_64, %c0_65] : memref<352x128xbf16, #tpu.memory_space<vmem>>, vector<64x128xbf16>
    %cst_66 = arith.constant dense<0.000000e+00> : vector<32x128xf32>
    %224 = tpu.matmul %222, %223, %cst_66 {dimension_numbers = #tpu.dot_dimension_numbers<[1], [0], [0], [1], [0, 0, 1, 1], [], []>} : vector<32x64xbf16>, vector<64x128xbf16>, vector<32x128xf32> -> vector<32x128xf32>
    %c334 = arith.constant 334 : index
    %c0_67 = arith.constant 0 : index
    %225 = vector.load %arg5[%c334, %c0_67] : memref<352x128xbf16, #tpu.memory_space<vmem>>, vector<1x128xbf16>
    %226 = arith.extf %225 : vector<1x128xbf16> to vector<1x128xf32>
    %227 = vector.broadcast %226 : vector<1x128xf32> to vector<32x128xf32>
    %228 = arith.addf %224, %227 : vector<32x128xf32>
    %cst_68 = arith.constant 0.000000e+00 : f32
    %229 = vector.broadcast %cst_68 : f32 to vector<32x128xf32>
    %230 = arith.maximumf %228, %229 : vector<32x128xf32>
    %231 = arith.truncf %230 : vector<32x128xf32> to vector<32x128xbf16>
    %c128 = arith.constant 128 : index
    %c0_69 = arith.constant 0 : index
    %232 = vector.load %arg5[%c128, %c0_69] : memref<352x128xbf16, #tpu.memory_space<vmem>>, vector<128x64xbf16>
    %cst_70 = arith.constant dense<0.000000e+00> : vector<32x64xf32>
    %233 = tpu.matmul %231, %232, %cst_70 {dimension_numbers = #tpu.dot_dimension_numbers<[1], [0], [0], [1], [0, 0, 1, 1], [], []>} : vector<32x128xbf16>, vector<128x64xbf16>, vector<32x64xf32> -> vector<32x64xf32>
    %c335 = arith.constant 335 : index
    %c0_71 = arith.constant 0 : index
    %234 = vector.load %arg5[%c335, %c0_71] : memref<352x128xbf16, #tpu.memory_space<vmem>>, vector<1x64xbf16>
    %235 = arith.extf %234 : vector<1x64xbf16> to vector<1x64xf32>
    %236 = vector.broadcast %235 : vector<1x64xf32> to vector<32x64xf32>
    %237 = arith.addf %233, %236 : vector<32x64xf32>
    %238 = arith.addf %221, %237 : vector<32x64xf32>
    %c336 = arith.constant 336 : index
    %c0_72 = arith.constant 0 : index
    %239 = vector.load %arg5[%c336, %c0_72] : memref<352x128xbf16, #tpu.memory_space<vmem>>, vector<1x64xbf16>
    %c337 = arith.constant 337 : index
    %c0_73 = arith.constant 0 : index
    %240 = vector.load %arg5[%c337, %c0_73] : memref<352x128xbf16, #tpu.memory_space<vmem>>, vector<1x64xbf16>
    %cst_74 = arith.constant dense<0.000000e+00> : vector<32xf32>
    %241 = vector.multi_reduction <add>, %238, %cst_74 [1] : vector<32x64xf32> to vector<32xf32>
    %242 = vector.shape_cast %241 : vector<32xf32> to vector<32x1xf32>
    %cst_75 = arith.constant 6.400000e+01 : f32
    %243 = vector.broadcast %cst_75 : f32 to vector<32x1xf32>
    %244 = arith.divf %242, %243 : vector<32x1xf32>
    %245 = vector.broadcast %244 : vector<32x1xf32> to vector<32x64xf32>
    %246 = arith.subf %238, %245 : vector<32x64xf32>
    %247 = arith.mulf %246, %246 : vector<32x64xf32>
    %cst_76 = arith.constant dense<0.000000e+00> : vector<32xf32>
    %248 = vector.multi_reduction <add>, %247, %cst_76 [1] : vector<32x64xf32> to vector<32xf32>
    %249 = vector.shape_cast %248 : vector<32xf32> to vector<32x1xf32>
    %cst_77 = arith.constant 6.400000e+01 : f32
    %250 = vector.broadcast %cst_77 : f32 to vector<32x1xf32>
    %251 = arith.divf %249, %250 : vector<32x1xf32>
    %252 = vector.broadcast %244 : vector<32x1xf32> to vector<32x64xf32>
    %253 = arith.subf %238, %252 : vector<32x64xf32>
    %cst_78 = arith.constant 9.99999974E-6 : f32
    %254 = vector.broadcast %cst_78 : f32 to vector<32x1xf32>
    %255 = arith.addf %251, %254 : vector<32x1xf32>
    %256 = math.rsqrt %255 : vector<32x1xf32>
    %257 = vector.broadcast %256 : vector<32x1xf32> to vector<32x64xf32>
    %258 = arith.mulf %253, %257 : vector<32x64xf32>
    %259 = arith.extf %239 : vector<1x64xbf16> to vector<1x64xf32>
    %260 = vector.broadcast %259 : vector<1x64xf32> to vector<32x64xf32>
    %261 = arith.mulf %258, %260 : vector<32x64xf32>
    %262 = arith.extf %240 : vector<1x64xbf16> to vector<1x64xf32>
    %263 = vector.broadcast %262 : vector<1x64xf32> to vector<32x64xf32>
    %264 = arith.addf %261, %263 : vector<32x64xf32>
    %c320 = arith.constant 320 : index
    %c0_79 = arith.constant 0 : index
    %265 = vector.load %arg5[%c320, %c0_79] : memref<352x128xbf16, #tpu.memory_space<vmem>>, vector<8x128xbf16>
    %266 = vector.extract_strided_slice %265 {offsets = [0, 0], sizes = [8, 32], strides = [1, 1]} : vector<8x128xbf16> to vector<8x32xbf16>
    %267 = arith.extf %266 : vector<8x32xbf16> to vector<8x32xf32>
    %cst_80 = arith.constant dense<0.000000e+00> : vector<8x64xf32>
    %268 = tpu.matmul %267, %264, %cst_80 {dimension_numbers = #tpu.dot_dimension_numbers<[1], [0], [0], [1], [0, 0, 1, 1], [], []>} : vector<8x32xf32>, vector<32x64xf32>, vector<8x64xf32> -> vector<8x64xf32>
    %269 = arith.truncf %268 : vector<8x64xf32> to vector<8x64xbf16>
    %c256 = arith.constant 256 : index
    %c0_81 = arith.constant 0 : index
    %270 = vector.load %arg5[%c256, %c0_81] : memref<352x128xbf16, #tpu.memory_space<vmem>>, vector<64x128xbf16>
    %cst_82 = arith.constant dense<0.000000e+00> : vector<8x128xf32>
    %271 = tpu.matmul %269, %270, %cst_82 {dimension_numbers = #tpu.dot_dimension_numbers<[1], [0], [0], [1], [0, 0, 1, 1], [], []>} : vector<8x64xbf16>, vector<64x128xbf16>, vector<8x128xf32> -> vector<8x128xf32>
    %c338 = arith.constant 338 : index
    %c0_83 = arith.constant 0 : index
    %272 = vector.load %arg5[%c338, %c0_83] : memref<352x128xbf16, #tpu.memory_space<vmem>>, vector<1x128xbf16>
    %273 = arith.extf %272 : vector<1x128xbf16> to vector<1x128xf32>
    %274 = vector.broadcast %273 : vector<1x128xf32> to vector<8x128xf32>
    %275 = arith.addf %271, %274 : vector<8x128xf32>
    %c0_84 = arith.constant 0 : index
    %c0_85 = arith.constant 0 : index
    %276 = vector.load %arg4[%c0_84, %c0_85] : memref<8x128xf32, #tpu.memory_space<vmem>>, vector<8x128xf32>
    tpu.vector_store %arg4[%c0_84, %c0_85], %275 {strides = array<i32>} : memref<8x128xf32, #tpu.memory_space<vmem>>, vector<8x128xf32>,
    return
  }
}

</mosaic_0001>

<llo_original>
// kernel: tpu_custom_call.1
$region0: #{tpu_custom_call.1}
  #allocation0 [shape = 'u32[]', space=smem, size = 0x4, offset = 0x4, fixed_abs, tag = 'smem constant byte address 0x4 - core index']
  #allocation1 [shape = 'u32[144,128]{1,0:T(1,128)}', space=vmem, size = 0x12000, scoped, tag = 'internal scratch']
  #allocation2 [shape = 'bf16[352,128]{1,0:T(16,128)(2,1)}', space=vmem, size = 0x16000, scoped, tag = 'scratch operand']
  #allocation3 [shape = 's32[1]{0}', space=sflag, size = 0x4, scoped, tag = 'scratch operand']
  #allocation8 [shape = 's32[]', space=sflag, size = 0x4, offset = 0, fixed_abs, tag = 'sflag constant byte address 0x0 - dummy sync flag']
  #allocation9 [shape = 's32[]', space=sflag, size = 0x4, offset = 0, fixed_abs, tag = 'sflag constant byte address 0x0 - dummy sync flag']
  #allocation10 [shape = 'u32[]', space=smem, size = 0x4, offset = 0x44, fixed_abs, tag = 'smem constant byte address 0x44 - assertion arg 0']
  #allocation11 [shape = 'u32[]', space=smem, size = 0x4, offset = 0x48, fixed_abs, tag = 'smem constant byte address 0x48 - assertion arg 1']
  %s0 = inlined_call_operand.hbm [shape: f32[32,64], index: 0, kind: input, shape index: {}]
  %s1 = inlined_call_operand.vmem [shape: bf16[128,192], index: 1, kind: input, shape index: {}]
  %s2 = inlined_call_operand.vmem [shape: bf16[416,128], index: 2, kind: input, shape index: {}]
  %s3 = inlined_call_operand.hbm [shape: bf16[352,128], index: 3, kind: input, shape index: {}]
  %s4 = inlined_call_operand.hbm [shape: f32[8,128], index: 4, kind: output, shape index: {}]
  %s5 = sld [smem:[#allocation0]]
  $region30: #{tpu_custom_call.1} parent=0
    _
  %s7 = ssub.s32 1, %s5
  %s8 = scalar_select 0, %s7, %s5
  $region1: #{tpu_custom_call.1} parent=0
    #allocation4 [shape = 'u8[16384]{0}', space=vmem, size = 0x4000, scoped, tag = 'input window, operand 0, single buffered']
    #allocation5 [shape = 's32[1]{0}', space=sflag, size = 0x4, scoped, tag = 'scoped memory for tpu_custom_call.1']
    #allocation6 [shape = 's32[1]{0}', space=sflag, size = 0x4, scoped, tag = 'scoped memory for tpu_custom_call.1']
    #allocation7 [shape = 'u8[4096]{0}', space=vmem, size = 0x1000, scoped, tag = 'output window, operand 0, single buffered']
    %9 = vsyncpa [#allocation5], 0
    %10 = vsyncpa [#allocation6], 0
    // Predicated region
    $region2: #{tpu_custom_call.1} parent=1 // pred_check
      _
    $region3: #{tpu_custom_call.1} parent=1 // pred_check_branch
      %12 = sbr.rel (0) target = $region5
    $region4: #{tpu_custom_call.1} parent=1 // pred_region
      %s14 = ssub.s32 512, 512
      %15 = vsyncadd [#allocation5], %s14
      %s16 = sshll.u32 [#allocation4], 4
      %s17 = int_to_ptr.vmem [resolvable:$true] %s16
      %22 = dma.hbm_to_vmem [thread:$0]  %s0, 512, %s17, [#allocation5], 128, 128, 8
    $region5: #{tpu_custom_call.1} parent=1 // pred_fallthru
      _
    // Predicated region
    $region6: #{tpu_custom_call.1} parent=1 // pred_check
      _
    $region7: #{tpu_custom_call.1} parent=1 // pred_check_branch
      %24 = sbr.rel (0) target = $region9
    $region8: #{tpu_custom_call.1} parent=1 // pred_region
      _
    $region9: #{tpu_custom_call.1} parent=1 // pred_fallthru
      _
    // Predicated region
    $region10: #{tpu_custom_call.1} parent=1 // pred_check
      _
    $region11: #{tpu_custom_call.1} parent=1 // pred_check_branch
      %26 = sbr.rel (0) target = $region13
    $region12: #{tpu_custom_call.1} parent=1 // pred_region
      _
    $region13: #{tpu_custom_call.1} parent=1 // pred_fallthru
      _
    // Predicated region
    $region14: #{tpu_custom_call.1} parent=1 // pred_check
      _
    $region15: #{tpu_custom_call.1} parent=1 // pred_check_branch
      %28 = sbr.rel (0) target = $region17
    $region16: #{tpu_custom_call.1} parent=1 // pred_region
      %29 = dma.done [#allocation5], 512
    $region17: #{tpu_custom_call.1} parent=1 // pred_fallthru
      _
    // Predicated region
    $region18: #{tpu_custom_call.1} parent=1 // pred_check
      _
    $region19: #{tpu_custom_call.1} parent=1 // pred_check_branch
      %32 = sbr.rel target = $region21
    $region20: #{tpu_custom_call.1} parent=1 // pred_region
      %33 = sst [smem:[#allocation10]] [#allocation9]
      %34 = sst [smem:[#allocation11]] [#allocation8]
    $region21: #{tpu_custom_call.1} parent=1 // pred_fallthru
      _
    %36 = shalt.err (0)
    %s38 = sshll.u32 [#allocation2], 4
    %s39 = int_to_ptr.vmem [resolvable:$true] %s38
    %41 = dma.hbm_to_vmem [thread:$0]  %s3, 2816, %s39, [#allocation3]
    %v42 = vld [vmem:[%s2 + $0x28] sm:$0xf]
    %v43 = vld [vmem:[%s2 + $0x2c] sm:$0xf]
    %v44 = vld [vmem:[%s2 + $0x30] sm:$0xf]
    %v45 = vld [vmem:[%s2 + $0x34] sm:$0xf]
    %v46 = vld [vmem:[%s2 + $0x38] sm:$0xf]
    %v47 = vld [vmem:[%s2 + $0x3c] sm:$0xf]
    %v48 = vld [vmem:[%s2 + $0x40] sm:$0xf]
    %v49 = vld [vmem:[%s2 + $0x44] sm:$0xf]
    %v50 = vunpack.c.l.bf16 %v42
    %v51 = vunpack.c.l.bf16 %v43
    %v52 = vunpack.c.l.bf16 %v44
    %v53 = vunpack.c.l.bf16 %v45
    %v54 = vunpack.c.l.bf16 %v46
    %v55 = vunpack.c.l.bf16 %v47
    %v56 = vunpack.c.l.bf16 %v48
    %v57 = vunpack.c.l.bf16 %v49
    %v58 = vld [vmem:[%s2 + $0x48] sm:$0x3]
    %v59 = vunpack.c.l.bf16 %v58
    %v60 = vld [vmem:[#allocation4] sm:$0xff]
    %v61 = vld [vmem:[#allocation4 + $0x8] sm:$0xff]
    %v62 = vld [vmem:[#allocation4 + $0x10] sm:$0xff]
    %v63 = vld [vmem:[#allocation4 + $0x18] sm:$0xff]
    %v64 = vpack.c.bf16 %v61, %v60
    %v65 = vpack.c.bf16 %v63, %v62
    %v66 = vld [vmem:[%s2] sm:$0xf]
    %v67 = vld [vmem:[%s2 + $0x4] sm:$0xf]
    %v68 = vld [vmem:[%s2 + $0x8] sm:$0xf]
    %v69 = vld [vmem:[%s2 + $0xc] sm:$0xf]
    %v70 = vld [vmem:[%s2 + $0x10] sm:$0xf]
    %v71 = vld [vmem:[%s2 + $0x14] sm:$0xf]
    %v72 = vld [vmem:[%s2 + $0x18] sm:$0xf]
    %v73 = vld [vmem:[%s2 + $0x1c] sm:$0xf]
    %v74 = vld [vmem:[%s2 + $0xc8] sm:$0x4]
    %v75 = vunpack.c.l.bf16 %v74
    %v76 = vlaneseq
    %v77 = vshrl.u32 %v76, 7
    %v78 = vsub.s32 4, %v77
    %v79 = vrot.slane %v75, %v78
    %v88 = vunpack.c.l.b16 %v66
    %v89 = vunpack.c.l.b16 %v67
    %v90 = vunpack.c.l.b16 %v68
    %v91 = vunpack.c.l.b16 %v69
    %v92 = vunpack.c.l.b16 %v70
    %v93 = vunpack.c.l.b16 %v71
    %v94 = vunpack.c.l.b16 %v72
    %v95 = vunpack.c.l.b16 %v73
    %v96 = vpack.c.b16 %v89, %v88
    %v97 = vpack.c.b16 %v91, %v90
    %v98 = vpack.c.b16 %v93, %v92
    %v99 = vpack.c.b16 %v95, %v94
    %vm104 = vcmask 523264
    %v106 = vsel %vm104, %v64, 0
    %v109 = vsel %vm104, %v65, 0
    %111 = vmatprep.subr.bf16.mxu0 0
    %112 = vmatpush1.bf16.msra.mxu0 %v96
    %113 = vmatprep.subr.bf16.mxu0 0
    %114 = vmatpush1.bf16.msra.mxu0 %v97
    %115 = vmatprep.subr.bf16.mxu0 0
    %116 = vmatpush1.bf16.msra.mxu0 %v98
    %117 = vmatprep.subr.bf16.mxu0 0
    %118 = vmatpush1.bf16.msra.mxu0 %v99
    %119 = vmatprep.subr.bf16.mxu0 0
    %120 = vmatpush1.bf16.msra.mxu0 0
    %121 = vmatprep.subr.bf16.mxu0 0
    %122 = vmatpush1.bf16.msra.mxu0 0
    %123 = vmatprep.subr.bf16.mxu0 0
    %124 = vmatpush1.bf16.msra.mxu0 0
    %125 = vmatprep.subr.bf16.mxu0 0
    %126 = vmatpush1.bf16.msra.mxu0 0
    %127 = vmatprep.subr.bf16.mxu0 0
    %128 = vmatpush1.bf16.msra.mxu0 0
    %129 = vmatprep.subr.bf16.mxu0 0
    %130 = vmatpush1.bf16.msra.mxu0 0
    %131 = vmatprep.subr.bf16.mxu0 0
    %132 = vmatpush1.bf16.msra.mxu0 0
    %133 = vmatprep.subr.bf16.mxu0 0
    %134 = vmatpush1.bf16.msra.mxu0 0
    %135 = vmatprep.subr.bf16.mxu0 0
    %136 = vmatpush1.bf16.msra.mxu0 0
    %137 = vmatprep.subr.bf16.mxu0 0
    %138 = vmatpush1.bf16.msra.mxu0 0
    %139 = vmatprep.subr.bf16.mxu0 0
    %140 = vmatpush1.bf16.msra.mxu0 0
    %141 = vmatprep.subr.bf16.mxu0 0
    %142 = vmatpush1.bf16.msra.mxu0 0
    %143 = vmatprep.mubr.bf16.mxu0 0
    %144 = vmatmul.mubr.bf16.gmra.mrb[0].mxu0 %v106
    %v145 = vpop.f32.mrb[0].mxu0
    %v146 = vadd.f32 %v79, %v145
    %v147 = vpop.f32.mrb[0].mxu0
    %v148 = vpop.f32.mrb[0].mxu0
    %v149 = vadd.f32 %v79, %v148
    %v150 = vpop.f32.mrb[0].mxu0
    %151 = vmatprep.mubr.bf16.mxu0 0
    %152 = vmatmul.mubr.bf16.gmra.mrb[0].mxu0 %v109
    %v153 = vpop.f32.mrb[0].mxu0
    %v154 = vadd.f32 %v79, %v153
    %v155 = vpop.f32.mrb[0].mxu0
    %v156 = vpop.f32.mrb[0].mxu0
    %v157 = vadd.f32 %v79, %v156
    %v158 = vpop.f32.mrb[0].mxu0
    %159 = vdwg.mxu0
    %v160 = vld [vmem:[%s2 + $0x20] sm:$0xf]
    %v161 = vld [vmem:[%s2 + $0x24] sm:$0xf]
    %v162 = vunpack.c.l.bf16 %v160
    %v163 = vunpack.c.l.bf16 %v161
    %v164 = vadd.f32 %v146, %v162
    %v165 = vadd.f32 %v149, %v163
    %v166 = vadd.f32 %v154, %v162
    %v167 = vadd.f32 %v157, %v163
    %v168 = vpack.c.bf16 %v165, %v164
    %v169 = vpack.c.bf16 %v167, %v166
    %v170 = vld [vmem:[%s1] sm:$0xff]
    %v171 = vld [vmem:[%s1 + $0x8] sm:$0xff]
    %v172 = vld [vmem:[%s1 + $0x10] sm:$0xff]
    %v173 = vld [vmem:[%s1 + $0x18] sm:$0xff]
    %v174 = vld [vmem:[%s1 + $0x20] sm:$0xff]
    %v175 = vld [vmem:[%s1 + $0x28] sm:$0xff]
    %v176 = vld [vmem:[%s1 + $0x30] sm:$0xff]
    %v177 = vld [vmem:[%s1 + $0x38] sm:$0xff]
    %v186 = vunpack.c.l.b16 %v170
    %v187 = vunpack.c.h.b16 %v170
    %v188 = vunpack.c.l.b16 %v171
    %v189 = vunpack.c.h.b16 %v171
    %v190 = vunpack.c.l.b16 %v172
    %v191 = vunpack.c.h.b16 %v172
    %v192 = vunpack.c.l.b16 %v173
    %v193 = vunpack.c.h.b16 %v173
    %v194 = vunpack.c.l.b16 %v174
    %v195 = vunpack.c.h.b16 %v174
    %v196 = vunpack.c.l.b16 %v175
    %v197 = vunpack.c.h.b16 %v175
    %v198 = vunpack.c.l.b16 %v176
    %v199 = vunpack.c.h.b16 %v176
    %v200 = vunpack.c.l.b16 %v177
    %v201 = vunpack.c.h.b16 %v177
    %v202 = vpack.c.b16 %v188, %v186
    %v203 = vpack.c.b16 %v189, %v187
    %v204 = vpack.c.b16 %v192, %v190
    %v205 = vpack.c.b16 %v193, %v191
    %v206 = vpack.c.b16 %v196, %v194
    %v207 = vpack.c.b16 %v197, %v195
    %v208 = vpack.c.b16 %v200, %v198
    %v209 = vpack.c.b16 %v201, %v199
    %v219 = vsel %vm104, %v168, 0
    %v222 = vsel %vm104, %v169, 0
    %224 = vmatprep.subr.bf16.mxu0 %v203
    %225 = vmatpush1.bf16.msra.mxu0 %v202
    %226 = vmatprep.subr.bf16.mxu0 %v205
    %227 = vmatpush1.bf16.msra.mxu0 %v204
    %228 = vmatprep.subr.bf16.mxu0 %v207
    %229 = vmatpush1.bf16.msra.mxu0 %v206
    %230 = vmatprep.subr.bf16.mxu0 %v209
    %231 = vmatpush1.bf16.msra.mxu0 %v208
    %232 = vmatprep.subr.bf16.mxu0 0
    %233 = vmatpush1.bf16.msra.mxu0 0
    %234 = vmatprep.subr.bf16.mxu0 0
    %235 = vmatpush1.bf16.msra.mxu0 0
    %236 = vmatprep.subr.bf16.mxu0 0
    %237 = vmatpush1.bf16.msra.mxu0 0
    %238 = vmatprep.subr.bf16.mxu0 0
    %239 = vmatpush1.bf16.msra.mxu0 0
    %240 = vmatprep.subr.bf16.mxu0 0
    %241 = vmatpush1.bf16.msra.mxu0 0
    %242 = vmatprep.subr.bf16.mxu0 0
    %243 = vmatpush1.bf16.msra.mxu0 0
    %244 = vmatprep.subr.bf16.mxu0 0
    %245 = vmatpush1.bf16.msra.mxu0 0
    %246 = vmatprep.subr.bf16.mxu0 0
    %247 = vmatpush1.bf16.msra.mxu0 0
    %248 = vmatprep.subr.bf16.mxu0 0
    %249 = vmatpush1.bf16.msra.mxu0 0
    %250 = vmatprep.subr.bf16.mxu0 0
    %251 = vmatpush1.bf16.msra.mxu0 0
    %252 = vmatprep.subr.bf16.mxu0 0
    %253 = vmatpush1.bf16.msra.mxu0 0
    %254 = vmatprep.subr.bf16.mxu0 0
    %255 = vmatpush1.bf16.msra.mxu0 0
    %256 = vmatprep.mubr.bf16.mxu0 0
    %257 = vmatmul.mubr.bf16.gmra.mrb[0].mxu0 %v219
    %v258 = vpop.f32.mrb[0].mxu0
    %v259 = vadd.f32 0.0, %v258
    %v260 = vpop.f32.mrb[0].mxu0
    %v261 = vadd.f32 0.0, %v260
    %v262 = vpop.f32.mrb[0].mxu0
    %v263 = vadd.f32 0.0, %v262
    %v264 = vpop.f32.mrb[0].mxu0
    %v265 = vadd.f32 0.0, %v264
    %266 = vmatprep.mubr.bf16.mxu0 0
    %267 = vmatmul.mubr.bf16.gmra.mrb[0].mxu0 %v222
    %v268 = vpop.f32.mrb[0].mxu0
    %v269 = vadd.f32 0.0, %v268
    %v270 = vpop.f32.mrb[0].mxu0
    %v271 = vadd.f32 0.0, %v270
    %v272 = vpop.f32.mrb[0].mxu0
    %v273 = vadd.f32 0.0, %v272
    %v274 = vpop.f32.mrb[0].mxu0
    %v275 = vadd.f32 0.0, %v274
    %276 = vdwg.mxu0
    %v277 = vlaneseq
    %v278 = vshrl.u32 %v277, 7
    %v279 = vsub.s32 5, %v278
    %v280 = vrot.slane %v75, %v279
    %v281 = vadd.f32 %v259, %v280
    %v282 = vadd.f32 %v263, %v280
    %v283 = vadd.f32 %v269, %v280
    %v284 = vadd.f32 %v273, %v280
    %v285 = vld [vmem:[%s2 + $0xc8] sm:$0x8]
    %v286 = vunpack.c.l.bf16 %v285
    %v287 = vlaneseq
    %v288 = vshrl.u32 %v287, 7
    %v289 = vsub.s32 6, %v288
    %v290 = vrot.slane %v286, %v289
    %292 = vrot.lane.b32.xlu0 %v290, 64
    %v293 = vpop.permute.xlu0 %292
    %v295 = vadd.f32 %v259, %v293
    %v296 = vadd.f32 %v263, %v293
    %v297 = vadd.f32 %v269, %v293
    %v298 = vadd.f32 %v273, %v293
    %v299 = vlaneseq
    %v300 = vshrl.u32 %v299, 7
    %v301 = vsub.s32 7, %v300
    %v302 = vrot.slane %v286, %v301
    %v303 = vadd.f32 %v261, %v302
    %v304 = vadd.f32 %v265, %v302
    %v305 = vadd.f32 %v271, %v302
    %v306 = vadd.f32 %v275, %v302
    %311 = vrot.lane.b32.xlu0 %v295, 64
    %v312 = vpop.permute.xlu0 %311
    %313 = vrot.lane.b32.xlu0 %v296, 64
    %v314 = vpop.permute.xlu0 %313
    %315 = vrot.lane.b32.xlu0 %v297, 64
    %v316 = vpop.permute.xlu0 %315
    %317 = vrot.lane.b32.xlu0 %v298, 64
    %v318 = vpop.permute.xlu0 %317
    %v323 = vmul.f32 %v281, %v312
    %v324 = vmul.f32 %v282, %v314
    %v325 = vmul.f32 %v281, %v316
    %v326 = vmul.f32 %v282, %v318
    %v327 = vmul.f32 %v283, %v312
    %v328 = vmul.f32 %v284, %v314
    %v329 = vmul.f32 %v283, %v316
    %v330 = vmul.f32 %v284, %v318
    %v332 = vsel %vm104, %v323, 0
    %v335 = vsel %vm104, %v324, 0
    %v338 = vsel %vm104, %v325, 0
    %v341 = vsel %vm104, %v326, 0
    %v344 = vsel %vm104, %v327, 0
    %v347 = vsel %vm104, %v328, 0
    %v350 = vsel %vm104, %v329, 0
    %v353 = vsel %vm104, %v330, 0
    %355 = vmatprep.subr.mxu0 0.0
    %356 = vmatpush1.msra.mxu0 %v50
    %357 = vmatprep.subr.mxu0 0.0
    %358 = vmatpush1.msra.mxu0 %v51
    %359 = vmatprep.subr.mxu0 0.0
    %360 = vmatpush1.msra.mxu0 %v52
    %361 = vmatprep.subr.mxu0 0.0
    %362 = vmatpush1.msra.mxu0 %v53
    %363 = vmatprep.subr.mxu0 0.0
    %364 = vmatpush1.msra.mxu0 %v54
    %365 = vmatprep.subr.mxu0 0.0
    %366 = vmatpush1.msra.mxu0 %v55
    %367 = vmatprep.subr.mxu0 0.0
    %368 = vmatpush1.msra.mxu0 %v56
    %369 = vmatprep.subr.mxu0 0.0
    %370 = vmatpush1.msra.mxu0 %v57
    %371 = vmatprep.subr.mxu0 0.0
    %372 = vmatpush1.msra.mxu0 0.0
    %373 = vmatprep.subr.mxu0 0.0
    %374 = vmatpush1.msra.mxu0 0.0
    %375 = vmatprep.subr.mxu0 0.0
    %376 = vmatpush1.msra.mxu0 0.0
    %377 = vmatprep.subr.mxu0 0.0
    %378 = vmatpush1.msra.mxu0 0.0
    %379 = vmatprep.subr.mxu0 0.0
    %380 = vmatpush1.msra.mxu0 0.0
    %381 = vmatprep.subr.mxu0 0.0
    %382 = vmatpush1.msra.mxu0 0.0
    %383 = vmatprep.subr.mxu0 0.0
    %384 = vmatpush1.msra.mxu0 0.0
    %385 = vmatprep.subr.mxu0 0.0
    %386 = vmatpush1.msra.mxu0 0.0
    %387 = vmatprep.subr.mxu0 0.0
    %388 = vmatpush1.msra.mxu0 0.0
    %389 = vmatprep.subr.mxu0 0.0
    %390 = vmatpush1.msra.mxu0 0.0
    %391 = vmatprep.subr.mxu0 0.0
    %392 = vmatpush1.msra.mxu0 0.0
    %393 = vmatprep.subr.mxu0 0.0
    %394 = vmatpush1.msra.mxu0 0.0
    %395 = vmatprep.subr.mxu0 0.0
    %396 = vmatpush1.msra.mxu0 0.0
    %397 = vmatprep.subr.mxu0 0.0
    %398 = vmatpush1.msra.mxu0 0.0
    %399 = vmatprep.subr.mxu0 0.0
    %400 = vmatpush1.msra.mxu0 0.0
    %401 = vmatprep.subr.mxu0 0.0
    %402 = vmatpush1.msra.mxu0 0.0
    %403 = vmatprep.subr.mxu0 0.0
    %404 = vmatpush1.msra.mxu0 0.0
    %405 = vmatprep.subr.mxu0 0.0
    %406 = vmatpush1.msra.mxu0 0.0
    %407 = vmatprep.subr.mxu0 0.0
    %408 = vmatpush1.msra.mxu0 0.0
    %409 = vmatprep.subr.mxu0 0.0
    %410 = vmatpush1.msra.mxu0 0.0
    %411 = vmatprep.subr.mxu0 0.0
    %412 = vmatpush1.msra.mxu0 0.0
    %413 = vmatprep.subr.mxu0 0.0
    %414 = vmatpush1.msra.mxu0 0.0
    %415 = vmatprep.subr.mxu0 0.0
    %416 = vmatpush1.msra.mxu0 0.0
    %417 = vmatprep.subr.mxu0 0.0
    %418 = vmatpush1.msra.mxu0 0.0
    %419 = vmatprep.mubr.f32.mxu0 0.0
    %420 = vmatmul.mubr.f32.gmra.mrb[0].mxu0 %v332
    %v421 = vpop.f32.mrb[0].mxu0
    %v422 = vadd.f32 0.0, %v421
    %v423 = vpop.f32.mrb[0].mxu0
    %424 = vmatprep.mubr.f32.mxu0 0.0
    %425 = vmatmul.mubr.f32.gmra.mrb[0].mxu0 %v335
    %v426 = vpop.f32.mrb[0].mxu0
    %v427 = vadd.f32 0.0, %v426
    %v428 = vpop.f32.mrb[0].mxu0
    %429 = vmatprep.mubr.f32.mxu0 0.0
    %430 = vmatmul.mubr.f32.gmra.mrb[0].mxu0 %v338
    %v431 = vpop.f32.mrb[0].mxu0
    %v432 = vadd.f32 0.0, %v431
    %v433 = vpop.f32.mrb[0].mxu0
    %434 = vmatprep.mubr.f32.mxu0 0.0
    %435 = vmatmul.mubr.f32.gmra.mrb[0].mxu0 %v341
    %v436 = vpop.f32.mrb[0].mxu0
    %v437 = vadd.f32 0.0, %v436
    %v438 = vpop.f32.mrb[0].mxu0
    %439 = vmatprep.mubr.f32.mxu0 0.0
    %440 = vmatmul.mubr.f32.gmra.mrb[0].mxu0 %v344
    %v441 = vpop.f32.mrb[0].mxu0
    %v442 = vadd.f32 0.0, %v441
    %v443 = vpop.f32.mrb[0].mxu0
    %444 = vmatprep.mubr.f32.mxu0 0.0
    %445 = vmatmul.mubr.f32.gmra.mrb[0].mxu0 %v347
    %v446 = vpop.f32.mrb[0].mxu0
    %v447 = vadd.f32 0.0, %v446
    %v448 = vpop.f32.mrb[0].mxu0
    %449 = vmatprep.mubr.f32.mxu0 0.0
    %450 = vmatmul.mubr.f32.gmra.mrb[0].mxu0 %v350
    %v451 = vpop.f32.mrb[0].mxu0
    %v452 = vadd.f32 0.0, %v451
    %v453 = vpop.f32.mrb[0].mxu0
    %454 = vmatprep.mubr.f32.mxu0 0.0
    %455 = vmatmul.mubr.f32.gmra.mrb[0].mxu0 %v353
    %v456 = vpop.f32.mrb[0].mxu0
    %v457 = vadd.f32 0.0, %v456
    %v458 = vpop.f32.mrb[0].mxu0
    %459 = vdwg.mxu0
    %vm460 = vcmask 31744
    %v461 = vsel %vm460, %v422, -inf
    %v462 = vsel %vm460, %v432, -inf
    %v463 = vmax.f32 %v461, %v462
    %v464 = vsel %vm460, %v427, -inf
    %v465 = vsel %vm460, %v437, -inf
    %v466 = vmax.f32 %v464, %v465
    %v467 = vsel %vm460, %v442, -inf
    %v468 = vsel %vm460, %v452, -inf
    %v469 = vmax.f32 %v467, %v468
    %v470 = vsel %vm460, %v447, -inf
    %v471 = vsel %vm460, %v457, -inf
    %v472 = vmax.f32 %v470, %v471
    %v473 = vsub.f32 %v422, %v463
    %v474 = vsub.f32 %v427, %v466
    %v475 = vsub.f32 %v432, %v463
    %v476 = vsub.f32 %v437, %v466
    %v477 = vsub.f32 %v442, %v469
    %v478 = vsub.f32 %v447, %v472
    %v479 = vsub.f32 %v452, %v469
    %v480 = vsub.f32 %v457, %v472
    %v481 = vmul.f32 %v473, 1.442695
    %v482 = vpow.pop %v481
    %v483 = vmul.f32 %v474, 1.442695
    %v484 = vpow.pop %v483
    %v485 = vmul.f32 %v475, 1.442695
    %v486 = vpow.pop %v485
    %v487 = vmul.f32 %v476, 1.442695
    %v488 = vpow.pop %v487
    %v489 = vmul.f32 %v477, 1.442695
    %v490 = vpow.pop %v489
    %v491 = vmul.f32 %v478, 1.442695
    %v492 = vpow.pop %v491
    %v493 = vmul.f32 %v479, 1.442695
    %v494 = vpow.pop %v493
    %v495 = vmul.f32 %v480, 1.442695
    %v496 = vpow.pop %v495
    %v497 = vsel %vm460, %v482, 0.0
    %v498 = vsel %vm460, %v486, 0.0
    %v499 = vadd.f32 %v497, %v498
    %v500 = vsel %vm460, %v484, 0.0
    %v501 = vsel %vm460, %v488, 0.0
    %v502 = vadd.f32 %v500, %v501
    %v503 = vsel %vm460, %v490, 0.0
    %v504 = vsel %vm460, %v494, 0.0
    %v505 = vadd.f32 %v503, %v504
    %v506 = vsel %vm460, %v492, 0.0
    %v507 = vsel %vm460, %v496, 0.0
    %v508 = vadd.f32 %v506, %v507
    %v509 = vrcp.pop %v499
    %v510 = vmul.f32 %v482, %v509
    %v511 = vrcp.pop %v502
    %v512 = vmul.f32 %v484, %v511
    %v513 = vmul.f32 %v486, %v509
    %v514 = vmul.f32 %v488, %v511
    %v515 = vrcp.pop %v505
    %v516 = vmul.f32 %v490, %v515
    %v517 = vrcp.pop %v508
    %v518 = vmul.f32 %v492, %v517
    %v519 = vmul.f32 %v494, %v515
    %v520 = vmul.f32 %v496, %v517
    %v522 = vsel %vm460, %v510, 0
    %v525 = vsel %vm460, %v512, 0
    %v528 = vsel %vm460, %v513, 0
    %v531 = vsel %vm460, %v514, 0
    %v534 = vsel %vm460, %v516, 0
    %v537 = vsel %vm460, %v518, 0
    %v540 = vsel %vm460, %v519, 0
    %v543 = vsel %vm460, %v520, 0
    %vm545 = vcmask 1043456
    %v547 = vsel %vm545, %v59, 0
    %549 = vmatprep.subr.mxu0 0.0
    %550 = vmatpush1.msra.mxu0 %v547
    %551 = vmatprep.subr.mxu0 0.0
    %552 = vmatpush1.msra.mxu0 0.0
    %553 = vmatprep.subr.mxu0 0.0
    %554 = vmatpush1.msra.mxu0 0.0
    %555 = vmatprep.subr.mxu0 0.0
    %556 = vmatpush1.msra.mxu0 0.0
    %557 = vmatprep.subr.mxu0 0.0
    %558 = vmatpush1.msra.mxu0 0.0
    %559 = vmatprep.subr.mxu0 0.0
    %560 = vmatpush1.msra.mxu0 0.0
    %561 = vmatprep.subr.mxu0 0.0
    %562 = vmatpush1.msra.mxu0 0.0
    %563 = vmatprep.subr.mxu0 0.0
    %564 = vmatpush1.msra.mxu0 0.0
    %565 = vmatprep.subr.mxu0 0.0
    %566 = vmatpush1.msra.mxu0 0.0
    %567 = vmatprep.subr.mxu0 0.0
    %568 = vmatpush1.msra.mxu0 0.0
    %569 = vmatprep.subr.mxu0 0.0
    %570 = vmatpush1.msra.mxu0 0.0
    %571 = vmatprep.subr.mxu0 0.0
    %572 = vmatpush1.msra.mxu0 0.0
    %573 = vmatprep.subr.mxu0 0.0
    %574 = vmatpush1.msra.mxu0 0.0
    %575 = vmatprep.subr.mxu0 0.0
    %576 = vmatpush1.msra.mxu0 0.0
    %577 = vmatprep.subr.mxu0 0.0
    %578 = vmatpush1.msra.mxu0 0.0
    %579 = vmatprep.subr.mxu0 0.0
    %580 = vmatpush1.msra.mxu0 0.0
    %581 = vmatprep.subr.mxu0 0.0
    %582 = vmatpush1.msra.mxu0 0.0
    %583 = vmatprep.subr.mxu0 0.0
    %584 = vmatpush1.msra.mxu0 0.0
    %585 = vmatprep.subr.mxu0 0.0
    %586 = vmatpush1.msra.mxu0 0.0
    %587 = vmatprep.subr.mxu0 0.0
    %588 = vmatpush1.msra.mxu0 0.0
    %589 = vmatprep.subr.mxu0 0.0
    %590 = vmatpush1.msra.mxu0 0.0
    %591 = vmatprep.subr.mxu0 0.0
    %592 = vmatpush1.msra.mxu0 0.0
    %593 = vmatprep.subr.mxu0 0.0
    %594 = vmatpush1.msra.mxu0 0.0
    %595 = vmatprep.subr.mxu0 0.0
    %596 = vmatpush1.msra.mxu0 0.0
    %597 = vmatprep.subr.mxu0 0.0
    %598 = vmatpush1.msra.mxu0 0.0
    %599 = vmatprep.subr.mxu0 0.0
    %600 = vmatpush1.msra.mxu0 0.0
    %601 = vmatprep.subr.mxu0 0.0
    %602 = vmatpush1.msra.mxu0 0.0
    %603 = vmatprep.subr.mxu0 0.0
    %604 = vmatpush1.msra.mxu0 0.0
    %605 = vmatprep.subr.mxu0 0.0
    %606 = vmatpush1.msra.mxu0 0.0
    %607 = vmatprep.subr.mxu0 0.0
    %608 = vmatpush1.msra.mxu0 0.0
    %609 = vmatprep.subr.mxu0 0.0
    %610 = vmatpush1.msra.mxu0 0.0
    %611 = vmatprep.subr.mxu0 0.0
    %612 = vmatpush1.msra.mxu0 0.0
    %613 = vmatprep.mubr.f32.mxu0 0.0
    %614 = vmatmul.mubr.f32.gmra.mrb[0].mxu0 %v522
    %v615 = vpop.f32.mrb[0].mxu0
    %v616 = vadd.f32 0.0, %v615
    %v617 = vpop.f32.mrb[0].mxu0
    %618 = vmatprep.mubr.f32.mxu0 0.0
    %619 = vmatmul.mubr.f32.gmra.mrb[0].mxu0 %v525
    %v620 = vpop.f32.mrb[0].mxu0
    %v621 = vadd.f32 0.0, %v620
    %v622 = vpop.f32.mrb[0].mxu0
    %623 = vmatprep.mubr.f32.mxu0 0.0
    %624 = vmatmul.mubr.f32.gmra.mrb[0].mxu0 %v528
    %v625 = vpop.f32.mrb[0].mxu0
    %v626 = vadd.f32 0.0, %v625
    %v627 = vpop.f32.mrb[0].mxu0
    %628 = vmatprep.mubr.f32.mxu0 0.0
    %629 = vmatmul.mubr.f32.gmra.mrb[0].mxu0 %v531
    %v630 = vpop.f32.mrb[0].mxu0
    %v631 = vadd.f32 0.0, %v630
    %v632 = vpop.f32.mrb[0].mxu0
    %633 = vmatprep.mubr.f32.mxu0 0.0
    %634 = vmatmul.mubr.f32.gmra.mrb[0].mxu0 %v534
    %v635 = vpop.f32.mrb[0].mxu0
    %v636 = vadd.f32 0.0, %v635
    %v637 = vpop.f32.mrb[0].mxu0
    %638 = vmatprep.mubr.f32.mxu0 0.0
    %639 = vmatmul.mubr.f32.gmra.mrb[0].mxu0 %v537
    %v640 = vpop.f32.mrb[0].mxu0
    %v641 = vadd.f32 0.0, %v640
    %v642 = vpop.f32.mrb[0].mxu0
    %643 = vmatprep.mubr.f32.mxu0 0.0
    %644 = vmatmul.mubr.f32.gmra.mrb[0].mxu0 %v540
    %v645 = vpop.f32.mrb[0].mxu0
    %v646 = vadd.f32 0.0, %v645
    %v647 = vpop.f32.mrb[0].mxu0
    %648 = vmatprep.mubr.f32.mxu0 0.0
    %649 = vmatmul.mubr.f32.gmra.mrb[0].mxu0 %v543
    %v650 = vpop.f32.mrb[0].mxu0
    %v651 = vadd.f32 0.0, %v650
    %v652 = vpop.f32.mrb[0].mxu0
    %653 = vdwg.mxu0
    %v654 = vmul.f32 %v616, %v303
    %v655 = vmul.f32 %v621, %v304
    %v656 = vmul.f32 %v626, %v305
    %v657 = vmul.f32 %v631, %v306
    %v658 = vmul.f32 %v636, %v303
    %v659 = vmul.f32 %v641, %v304
    %v660 = vmul.f32 %v646, %v305
    %v661 = vmul.f32 %v651, %v306
    %v662 = vsel %vm104, %v654, 0.0
    %v663 = vsel %vm104, %v656, 0.0
    %v664 = vadd.f32 %v662, %v663
    %v665 = vsel %vm104, %v655, 0.0
    %v666 = vsel %vm104, %v657, 0.0
    %v667 = vadd.f32 %v665, %v666
    %v668 = vsel %vm104, %v658, 0.0
    %v669 = vsel %vm104, %v660, 0.0
    %v670 = vadd.f32 %v668, %v669
    %v671 = vsel %vm104, %v659, 0.0
    %v672 = vsel %vm104, %v661, 0.0
    %v673 = vadd.f32 %v671, %v672
    %v674 = vpack.c.bf16 %v667, %v664
    %v675 = vpack.c.bf16 %v673, %v670
    %v676 = vld [vmem:[%s2 + $0x48] sm:$0xc]
    %v677 = vld [vmem:[%s2 + $0x4c] sm:$0xf]
    %v678 = vld [vmem:[%s2 + $0x50] sm:$0xf]
    %v679 = vld [vmem:[%s2 + $0x54] sm:$0xf]
    %v680 = vld [vmem:[%s2 + $0x58] sm:$0xf]
    %v681 = vld [vmem:[%s2 + $0x5c] sm:$0xf]
    %v682 = vld [vmem:[%s2 + $0x60] sm:$0xf]
    %v683 = vld [vmem:[%s2 + $0x64] sm:$0xf]
    %v684 = vld [vmem:[%s2 + $0x68] sm:$0x3]
    %v685 = vld [vmem:[%s2 + $0xcc] sm:$0x1]
    %v686 = vunpack.c.l.bf16 %v685
    %v687 = vlaneseq
    %v688 = vshrl.u32 %v687, 7
    %v689 = vsub.s32 0, %v688
    %v690 = vrot.slane %v686, %v689
    %v700 = vunpack.c.l.b16 %v676
    %v701 = vunpack.c.l.b16 %v677
    %v702 = vunpack.c.l.b16 %v678
    %v703 = vunpack.c.l.b16 %v679
    %v704 = vunpack.c.l.b16 %v680
    %v705 = vunpack.c.l.b16 %v681
    %v706 = vunpack.c.l.b16 %v682
    %v707 = vunpack.c.l.b16 %v683
    %v708 = vunpack.c.l.b16 %v684
    %v709 = vpack.c.b16 %v701, %v700
    %v710 = vpack.c.b16 %v703, %v702
    %v711 = vpack.c.b16 %v705, %v704
    %v712 = vpack.c.b16 %v707, %v706
    %v713 = vpack.c.b16 %v708, %v708
    %vm714 = vcmask 1045504
    %v715 = vrot.slane %v709, 2
    %v716 = vrot.slane %v710, 2
    %v717 = vsel %vm714, %v715, %v716
    %v718 = vrot.slane %v711, 2
    %v719 = vsel %vm714, %v716, %v718
    %v720 = vrot.slane %v712, 2
    %v721 = vsel %vm714, %v718, %v720
    %v722 = vrot.slane %v713, 2
    %v723 = vsel %vm714, %v720, %v722
    %v729 = vsel %vm104, %v674, 0
    %v732 = vsel %vm104, %v675, 0
    %734 = vmatprep.subr.bf16.mxu0 0
    %735 = vmatpush1.bf16.msra.mxu0 %v717
    %736 = vmatprep.subr.bf16.mxu0 0
    %737 = vmatpush1.bf16.msra.mxu0 %v719
    %738 = vmatprep.subr.bf16.mxu0 0
    %739 = vmatpush1.bf16.msra.mxu0 %v721
    %740 = vmatprep.subr.bf16.mxu0 0
    %741 = vmatpush1.bf16.msra.mxu0 %v723
    %742 = vmatprep.subr.bf16.mxu0 0
    %743 = vmatpush1.bf16.msra.mxu0 0
    %744 = vmatprep.subr.bf16.mxu0 0
    %745 = vmatpush1.bf16.msra.mxu0 0
    %746 = vmatprep.subr.bf16.mxu0 0
    %747 = vmatpush1.bf16.msra.mxu0 0
    %748 = vmatprep.subr.bf16.mxu0 0
    %749 = vmatpush1.bf16.msra.mxu0 0
    %750 = vmatprep.subr.bf16.mxu0 0
    %751 = vmatpush1.bf16.msra.mxu0 0
    %752 = vmatprep.subr.bf16.mxu0 0
    %753 = vmatpush1.bf16.msra.mxu0 0
    %754 = vmatprep.subr.bf16.mxu0 0
    %755 = vmatpush1.bf16.msra.mxu0 0
    %756 = vmatprep.subr.bf16.mxu0 0
    %757 = vmatpush1.bf16.msra.mxu0 0
    %758 = vmatprep.subr.bf16.mxu0 0
    %759 = vmatpush1.bf16.msra.mxu0 0
    %760 = vmatprep.subr.bf16.mxu0 0
    %761 = vmatpush1.bf16.msra.mxu0 0
    %762 = vmatprep.subr.bf16.mxu0 0
    %763 = vmatpush1.bf16.msra.mxu0 0
    %764 = vmatprep.subr.bf16.mxu0 0
    %765 = vmatpush1.bf16.msra.mxu0 0
    %766 = vmatprep.mubr.bf16.mxu0 0
    %767 = vmatmul.mubr.bf16.gmra.mrb[0].mxu0 %v729
    %v768 = vpop.f32.mrb[0].mxu0
    %v769 = vadd.f32 %v690, %v768
    %v770 = vpop.f32.mrb[0].mxu0
    %v771 = vpop.f32.mrb[0].mxu0
    %v772 = vadd.f32 %v690, %v771
    %v773 = vpop.f32.mrb[0].mxu0
    %774 = vmatprep.mubr.bf16.mxu0 0
    %775 = vmatmul.mubr.bf16.gmra.mrb[0].mxu0 %v732
    %v776 = vpop.f32.mrb[0].mxu0
    %v777 = vadd.f32 %v690, %v776
    %v778 = vpop.f32.mrb[0].mxu0
    %v779 = vpop.f32.mrb[0].mxu0
    %v780 = vadd.f32 %v690, %v779
    %v781 = vpop.f32.mrb[0].mxu0
    %782 = vdwg.mxu0
    %v783 = vadd.f32 %v164, %v769
    %v784 = vadd.f32 %v165, %v772
    %v785 = vadd.f32 %v166, %v777
    %v786 = vadd.f32 %v167, %v780
    %v787 = vld [vmem:[%s2 + $0xcc] sm:$0x2]
    %v788 = vsel %vm104, %v783, 0.0
    %789 = vadd.xlane.f32.xlu0 %v788
    %v790 = vpop.xlane.xlu0 %789
    %v791 = vsel %vm104, %v784, 0.0
    %792 = vadd.xlane.f32.xlu0 %v791
    %v793 = vpop.xlane.xlu0 %792
    %v794 = vsel %vm104, %v785, 0.0
    %795 = vadd.xlane.f32.xlu0 %v794
    %v796 = vpop.xlane.xlu0 %795
    %v797 = vsel %vm104, %v786, 0.0
    %798 = vadd.xlane.f32.xlu0 %v797
    %v799 = vpop.xlane.xlu0 %798
    %v800 = vrcp.pop 64.0
    %v801 = vmul.f32 %v790, %v800
    %v802 = vmul.f32 %v793, %v800
    %v803 = vmul.f32 %v796, %v800
    %v804 = vmul.f32 %v799, %v800
    %v805 = vsub.f32 %v783, %v801
    %v806 = vsub.f32 %v784, %v802
    %v807 = vsub.f32 %v785, %v803
    %v808 = vsub.f32 %v786, %v804
    %v809 = vmul.f32 %v805, %v805
    %v810 = vmul.f32 %v806, %v806
    %v811 = vmul.f32 %v807, %v807
    %v812 = vmul.f32 %v808, %v808
    %v813 = vsel %vm104, %v809, 0.0
    %814 = vadd.xlane.f32.xlu0 %v813
    %v815 = vpop.xlane.xlu0 %814
    %v816 = vsel %vm104, %v810, 0.0
    %817 = vadd.xlane.f32.xlu0 %v816
    %v818 = vpop.xlane.xlu0 %817
    %v819 = vsel %vm104, %v811, 0.0
    %820 = vadd.xlane.f32.xlu0 %v819
    %v821 = vpop.xlane.xlu0 %820
    %v822 = vsel %vm104, %v812, 0.0
    %823 = vadd.xlane.f32.xlu0 %v822
    %v824 = vpop.xlane.xlu0 %823
    %v825 = vmul.f32 %v815, %v800
    %v826 = vmul.f32 %v818, %v800
    %v827 = vmul.f32 %v821, %v800
    %v828 = vmul.f32 %v824, %v800
    %v829 = vadd.f32 %v825, 1e-05
    %v830 = vadd.f32 %v826, 1e-05
    %v831 = vadd.f32 %v827, 1e-05
    %v832 = vadd.f32 %v828, 1e-05
    %v833 = vrsqrt.pop %v829
    %v834 = vrsqrt.pop %v830
    %v835 = vrsqrt.pop %v831
    %v836 = vrsqrt.pop %v832
    %v837 = vmul.f32 %v805, %v833
    %v838 = vmul.f32 %v806, %v834
    %v839 = vmul.f32 %v807, %v835
    %v840 = vmul.f32 %v808, %v836
    %v841 = vlaneseq
    %v842 = vshrl.u32 %v841, 7
    %v843 = vsub.s32 1, %v842
    %v844 = vrot.slane %v686, %v843
    %v845 = vmul.f32 %v837, %v844
    %v846 = vmul.f32 %v838, %v844
    %v847 = vmul.f32 %v839, %v844
    %v848 = vmul.f32 %v840, %v844
    %v849 = vunpack.c.l.bf16 %v787
    %v850 = vlaneseq
    %v851 = vshrl.u32 %v850, 7
    %v852 = vsub.s32 2, %v851
    %v853 = vrot.slane %v849, %v852
    %v854 = vadd.f32 %v845, %v853
    %v855 = vadd.f32 %v846, %v853
    %v856 = vadd.f32 %v847, %v853
    %v857 = vadd.f32 %v848, %v853
    %v858 = vpack.c.bf16 %v855, %v854
    %v859 = vpack.c.bf16 %v857, %v856
    %v860 = vld [vmem:[%s2 + $0x68] sm:$0xc]
    %v861 = vld [vmem:[%s2 + $0x6c] sm:$0xf]
    %v862 = vld [vmem:[%s2 + $0x70] sm:$0xf]
    %v863 = vld [vmem:[%s2 + $0x74] sm:$0xf]
    %v864 = vld [vmem:[%s2 + $0x78] sm:$0xf]
    %v865 = vld [vmem:[%s2 + $0x7c] sm:$0xf]
    %v866 = vld [vmem:[%s2 + $0x80] sm:$0xf]
    %v867 = vld [vmem:[%s2 + $0x84] sm:$0xf]
    %v868 = vld [vmem:[%s2 + $0x88] sm:$0x3]
    %v869 = vlaneseq
    %v870 = vshrl.u32 %v869, 7
    %v871 = vsub.s32 3, %v870
    %v872 = vrot.slane %v849, %v871
    %v882 = vunpack.c.l.b16 %v860
    %v883 = vunpack.c.l.b16 %v861
    %v884 = vunpack.c.l.b16 %v862
    %v885 = vunpack.c.l.b16 %v863
    %v886 = vunpack.c.l.b16 %v864
    %v887 = vunpack.c.l.b16 %v865
    %v888 = vunpack.c.l.b16 %v866
    %v889 = vunpack.c.l.b16 %v867
    %v890 = vunpack.c.l.b16 %v868
    %v891 = vpack.c.b16 %v883, %v882
    %v892 = vpack.c.b16 %v885, %v884
    %v893 = vpack.c.b16 %v887, %v886
    %v894 = vpack.c.b16 %v889, %v888
    %v895 = vpack.c.b16 %v890, %v890
    %v896 = vrot.slane %v891, 2
    %v897 = vrot.slane %v892, 2
    %v898 = vsel %vm714, %v896, %v897
    %v899 = vrot.slane %v893, 2
    %v900 = vsel %vm714, %v897, %v899
    %v901 = vrot.slane %v894, 2
    %v902 = vsel %vm714, %v899, %v901
    %v903 = vrot.slane %v895, 2
    %v904 = vsel %vm714, %v901, %v903
    %v910 = vsel %vm104, %v858, 0
    %v913 = vsel %vm104, %v859, 0
    %915 = vmatprep.subr.bf16.mxu0 0
    %916 = vmatpush1.bf16.msra.mxu0 %v898
    %917 = vmatprep.subr.bf16.mxu0 0
    %918 = vmatpush1.bf16.msra.mxu0 %v900
    %919 = vmatprep.subr.bf16.mxu0 0
    %920 = vmatpush1.bf16.msra.mxu0 %v902
    %921 = vmatprep.subr.bf16.mxu0 0
    %922 = vmatpush1.bf16.msra.mxu0 %v904
    %923 = vmatprep.subr.bf16.mxu0 0
    %924 = vmatpush1.bf16.msra.mxu0 0
    %925 = vmatprep.subr.bf16.mxu0 0
    %926 = vmatpush1.bf16.msra.mxu0 0
    %927 = vmatprep.subr.bf16.mxu0 0
    %928 = vmatpush1.bf16.msra.mxu0 0
    %929 = vmatprep.subr.bf16.mxu0 0
    %930 = vmatpush1.bf16.msra.mxu0 0
    %931 = vmatprep.subr.bf16.mxu0 0
    %932 = vmatpush1.bf16.msra.mxu0 0
    %933 = vmatprep.subr.bf16.mxu0 0
    %934 = vmatpush1.bf16.msra.mxu0 0
    %935 = vmatprep.subr.bf16.mxu0 0
    %936 = vmatpush1.bf16.msra.mxu0 0
    %937 = vmatprep.subr.bf16.mxu0 0
    %938 = vmatpush1.bf16.msra.mxu0 0
    %939 = vmatprep.subr.bf16.mxu0 0
    %940 = vmatpush1.bf16.msra.mxu0 0
    %941 = vmatprep.subr.bf16.mxu0 0
    %942 = vmatpush1.bf16.msra.mxu0 0
    %943 = vmatprep.subr.bf16.mxu0 0
    %944 = vmatpush1.bf16.msra.mxu0 0
    %945 = vmatprep.subr.bf16.mxu0 0
    %946 = vmatpush1.bf16.msra.mxu0 0
    %947 = vmatprep.mubr.bf16.mxu0 0
    %948 = vmatmul.mubr.bf16.gmra.mrb[0].mxu0 %v910
    %v949 = vpop.f32.mrb[0].mxu0
    %v950 = vadd.f32 %v872, %v949
    %v951 = vpop.f32.mrb[0].mxu0
    %v952 = vpop.f32.mrb[0].mxu0
    %v953 = vadd.f32 %v872, %v952
    %v954 = vpop.f32.mrb[0].mxu0
    %955 = vmatprep.mubr.bf16.mxu0 0
    %956 = vmatmul.mubr.bf16.gmra.mrb[0].mxu0 %v913
    %v957 = vpop.f32.mrb[0].mxu0
    %v958 = vadd.f32 %v872, %v957
    %v959 = vpop.f32.mrb[0].mxu0
    %v960 = vpop.f32.mrb[0].mxu0
    %v961 = vadd.f32 %v872, %v960
    %v962 = vpop.f32.mrb[0].mxu0
    %963 = vdwg.mxu0
    %v964 = vmax.f32 %v950, 0.0
    %v965 = vmax.f32 %v953, 0.0
    %v966 = vmax.f32 %v958, 0.0
    %v967 = vmax.f32 %v961, 0.0
    %v968 = vpack.c.bf16 %v965, %v964
    %v969 = vpack.c.bf16 %v967, %v966
    %v970 = vld [vmem:[%s2 + $0x88] sm:$0xc]
    %v971 = vld [vmem:[%s2 + $0x8c] sm:$0xf]
    %v972 = vld [vmem:[%s2 + $0x90] sm:$0xf]
    %v973 = vld [vmem:[%s2 + $0x94] sm:$0xf]
    %v974 = vld [vmem:[%s2 + $0x98] sm:$0xf]
    %v975 = vld [vmem:[%s2 + $0x9c] sm:$0xf]
    %v976 = vld [vmem:[%s2 + $0xa0] sm:$0xf]
    %v977 = vld [vmem:[%s2 + $0xa4] sm:$0xf]
    %v978 = vld [vmem:[%s2 + $0xa8] sm:$0xf]
    %v979 = vld [vmem:[%s2 + $0xac] sm:$0xf]
    %v980 = vld [vmem:[%s2 + $0xb0] sm:$0xf]
    %v981 = vld [vmem:[%s2 + $0xb4] sm:$0xf]
    %v982 = vld [vmem:[%s2 + $0xb8] sm:$0xf]
    %v983 = vld [vmem:[%s2 + $0xbc] sm:$0xf]
    %v984 = vld [vmem:[%s2 + $0xc0] sm:$0xf]
    %v985 = vld [vmem:[%s2 + $0xc4] sm:$0xf]
    %v986 = vld [vmem:[%s2 + $0xc8] sm:$0x3]
    %v987 = vld [vmem:[%s2 + $0xcc] sm:$0x4]
    %v988 = vunpack.c.l.bf16 %v987
    %v989 = vlaneseq
    %v990 = vshrl.u32 %v989, 7
    %v991 = vsub.s32 4, %v990
    %v992 = vrot.slane %v988, %v991
    %v1010 = vunpack.c.l.b16 %v970
    %v1011 = vunpack.c.l.b16 %v971
    %v1012 = vunpack.c.l.b16 %v972
    %v1013 = vunpack.c.l.b16 %v973
    %v1014 = vunpack.c.l.b16 %v974
    %v1015 = vunpack.c.l.b16 %v975
    %v1016 = vunpack.c.l.b16 %v976
    %v1017 = vunpack.c.l.b16 %v977
    %v1018 = vunpack.c.l.b16 %v978
    %v1019 = vunpack.c.l.b16 %v979
    %v1020 = vunpack.c.l.b16 %v980
    %v1021 = vunpack.c.l.b16 %v981
    %v1022 = vunpack.c.l.b16 %v982
    %v1023 = vunpack.c.l.b16 %v983
    %v1024 = vunpack.c.l.b16 %v984
    %v1025 = vunpack.c.l.b16 %v985
    %v1026 = vunpack.c.l.b16 %v986
    %v1027 = vpack.c.b16 %v1011, %v1010
    %v1028 = vpack.c.b16 %v1013, %v1012
    %v1029 = vpack.c.b16 %v1015, %v1014
    %v1030 = vpack.c.b16 %v1017, %v1016
    %v1031 = vpack.c.b16 %v1019, %v1018
    %v1032 = vpack.c.b16 %v1021, %v1020
    %v1033 = vpack.c.b16 %v1023, %v1022
    %v1034 = vpack.c.b16 %v1025, %v1024
    %v1035 = vpack.c.b16 %v1026, %v1026
    %v1036 = vrot.slane %v1027, 2
    %v1037 = vrot.slane %v1028, 2
    %v1038 = vsel %vm714, %v1036, %v1037
    %v1039 = vrot.slane %v1029, 2
    %v1040 = vsel %vm714, %v1037, %v1039
    %v1041 = vrot.slane %v1030, 2
    %v1042 = vsel %vm714, %v1039, %v1041
    %v1043 = vrot.slane %v1031, 2
    %v1044 = vsel %vm714, %v1041, %v1043
    %v1045 = vrot.slane %v1032, 2
    %v1046 = vsel %vm714, %v1043, %v1045
    %v1047 = vrot.slane %v1033, 2
    %v1048 = vsel %vm714, %v1045, %v1047
    %v1049 = vrot.slane %v1034, 2
    %v1050 = vsel %vm714, %v1047, %v1049
    %v1051 = vrot.slane %v1035, 2
    %v1052 = vsel %vm714, %v1049, %v1051
    %1061 = vmatprep.subr.bf16.mxu0 0
    %1062 = vmatpush1.bf16.msra.mxu0 %v1038
    %1063 = vmatprep.subr.bf16.mxu0 0
    %1064 = vmatpush1.bf16.msra.mxu0 %v1040
    %1065 = vmatprep.subr.bf16.mxu0 0
    %1066 = vmatpush1.bf16.msra.mxu0 %v1042
    %1067 = vmatprep.subr.bf16.mxu0 0
    %1068 = vmatpush1.bf16.msra.mxu0 %v1044
    %1069 = vmatprep.subr.bf16.mxu0 0
    %1070 = vmatpush1.bf16.msra.mxu0 %v1046
    %1071 = vmatprep.subr.bf16.mxu0 0
    %1072 = vmatpush1.bf16.msra.mxu0 %v1048
    %1073 = vmatprep.subr.bf16.mxu0 0
    %1074 = vmatpush1.bf16.msra.mxu0 %v1050
    %1075 = vmatprep.subr.bf16.mxu0 0
    %1076 = vmatpush1.bf16.msra.mxu0 %v1052
    %1077 = vmatprep.subr.bf16.mxu0 0
    %1078 = vmatpush1.bf16.msra.mxu0 0
    %1079 = vmatprep.subr.bf16.mxu0 0
    %1080 = vmatpush1.bf16.msra.mxu0 0
    %1081 = vmatprep.subr.bf16.mxu0 0
    %1082 = vmatpush1.bf16.msra.mxu0 0
    %1083 = vmatprep.subr.bf16.mxu0 0
    %1084 = vmatpush1.bf16.msra.mxu0 0
    %1085 = vmatprep.subr.bf16.mxu0 0
    %1086 = vmatpush1.bf16.msra.mxu0 0
    %1087 = vmatprep.subr.bf16.mxu0 0
    %1088 = vmatpush1.bf16.msra.mxu0 0
    %1089 = vmatprep.subr.bf16.mxu0 0
    %1090 = vmatpush1.bf16.msra.mxu0 0
    %1091 = vmatprep.subr.bf16.mxu0 0
    %1092 = vmatpush1.bf16.msra.mxu0 0
    %1093 = vmatprep.mubr.bf16.mxu0 0
    %1094 = vmatmul.mubr.bf16.gmra.mrb[0].mxu0 %v968
    %v1095 = vpop.f32.mrb[0].mxu0
    %v1096 = vadd.f32 %v992, %v1095
    %v1097 = vpop.f32.mrb[0].mxu0
    %v1098 = vpop.f32.mrb[0].mxu0
    %v1099 = vadd.f32 %v992, %v1098
    %v1100 = vpop.f32.mrb[0].mxu0
    %1101 = vmatprep.mubr.bf16.mxu0 0
    %1102 = vmatmul.mubr.bf16.gmra.mrb[0].mxu0 %v969
    %v1103 = vpop.f32.mrb[0].mxu0
    %v1104 = vadd.f32 %v992, %v1103
    %v1105 = vpop.f32.mrb[0].mxu0
    %v1106 = vpop.f32.mrb[0].mxu0
    %v1107 = vadd.f32 %v992, %v1106
    %v1108 = vpop.f32.mrb[0].mxu0
    %1109 = vdwg.mxu0
    %v1110 = vadd.f32 %v854, %v1096
    %v1111 = vadd.f32 %v855, %v1099
    %v1112 = vadd.f32 %v856, %v1104
    %v1113 = vadd.f32 %v857, %v1107
    %v1114 = vld [vmem:[%s2 + $0xcc] sm:$0x8]
    %v1115 = vsel %vm104, %v1110, 0.0
    %1116 = vadd.xlane.f32.xlu0 %v1115
    %v1117 = vpop.xlane.xlu0 %1116
    %v1118 = vsel %vm104, %v1111, 0.0
    %1119 = vadd.xlane.f32.xlu0 %v1118
    %v1120 = vpop.xlane.xlu0 %1119
    %v1121 = vsel %vm104, %v1112, 0.0
    %1122 = vadd.xlane.f32.xlu0 %v1121
    %v1123 = vpop.xlane.xlu0 %1122
    %v1124 = vsel %vm104, %v1113, 0.0
    %1125 = vadd.xlane.f32.xlu0 %v1124
    %v1126 = vpop.xlane.xlu0 %1125
    %v1127 = vmul.f32 %v1117, %v800
    %v1128 = vmul.f32 %v1120, %v800
    %v1129 = vmul.f32 %v1123, %v800
    %v1130 = vmul.f32 %v1126, %v800
    %v1131 = vsub.f32 %v1110, %v1127
    %v1132 = vsub.f32 %v1111, %v1128
    %v1133 = vsub.f32 %v1112, %v1129
    %v1134 = vsub.f32 %v1113, %v1130
    %v1135 = vmul.f32 %v1131, %v1131
    %v1136 = vmul.f32 %v1132, %v1132
    %v1137 = vmul.f32 %v1133, %v1133
    %v1138 = vmul.f32 %v1134, %v1134
    %v1139 = vsel %vm104, %v1135, 0.0
    %1140 = vadd.xlane.f32.xlu0 %v1139
    %v1141 = vpop.xlane.xlu0 %1140
    %v1142 = vsel %vm104, %v1136, 0.0
    %1143 = vadd.xlane.f32.xlu0 %v1142
    %v1144 = vpop.xlane.xlu0 %1143
    %v1145 = vsel %vm104, %v1137, 0.0
    %1146 = vadd.xlane.f32.xlu0 %v1145
    %v1147 = vpop.xlane.xlu0 %1146
    %v1148 = vsel %vm104, %v1138, 0.0
    %1149 = vadd.xlane.f32.xlu0 %v1148
    %v1150 = vpop.xlane.xlu0 %1149
    %v1151 = vmul.f32 %v1141, %v800
    %v1152 = vmul.f32 %v1144, %v800
    %v1153 = vmul.f32 %v1147, %v800
    %v1154 = vmul.f32 %v1150, %v800
    %v1155 = vadd.f32 %v1151, 1e-05
    %v1156 = vadd.f32 %v1152, 1e-05
    %v1157 = vadd.f32 %v1153, 1e-05
    %v1158 = vadd.f32 %v1154, 1e-05
    %v1159 = vrsqrt.pop %v1155
    %v1160 = vrsqrt.pop %v1156
    %v1161 = vrsqrt.pop %v1157
    %v1162 = vrsqrt.pop %v1158
    %v1163 = vmul.f32 %v1131, %v1159
    %v1164 = vmul.f32 %v1132, %v1160
    %v1165 = vmul.f32 %v1133, %v1161
    %v1166 = vmul.f32 %v1134, %v1162
    %v1167 = vlaneseq
    %v1168 = vshrl.u32 %v1167, 7
    %v1169 = vsub.s32 5, %v1168
    %v1170 = vrot.slane %v988, %v1169
    %v1171 = vmul.f32 %v1163, %v1170
    %v1172 = vmul.f32 %v1164, %v1170
    %v1173 = vmul.f32 %v1165, %v1170
    %v1174 = vmul.f32 %v1166, %v1170
    %v1175 = vunpack.c.l.bf16 %v1114
    %v1176 = vlaneseq
    %v1177 = vshrl.u32 %v1176, 7
    %v1178 = vsub.s32 6, %v1177
    %v1179 = vrot.slane %v1175, %v1178
    %v1180 = vadd.f32 %v1171, %v1179
    %v1181 = vadd.f32 %v1172, %v1179
    %v1182 = vadd.f32 %v1173, %v1179
    %v1183 = vadd.f32 %v1174, %v1179
    %s1184 = smul.u32 4, 44
    %s1185 = smul.u32 %s1184, 1
    %s1186 = sshll.u32 %s1185, 4
    %1187 = dma.done [#allocation3], %s1186
    %v1188 = vpack.c.bf16 %v1181, %v1180
    %v1189 = vpack.c.bf16 %v1183, %v1182
    %v1190 = vld [vmem:[%s1 + $0x40] sm:$0xff]
    %v1191 = vld [vmem:[%s1 + $0x48] sm:$0xff]
    %v1192 = vld [vmem:[%s1 + $0x50] sm:$0xff]
    %v1193 = vld [vmem:[%s1 + $0x58] sm:$0xff]
    %v1194 = vld [vmem:[%s1 + $0x60] sm:$0xff]
    %v1195 = vld [vmem:[%s1 + $0x68] sm:$0xff]
    %v1196 = vld [vmem:[%s1 + $0x70] sm:$0xff]
    %v1197 = vld [vmem:[%s1 + $0x78] sm:$0xff]
    %v1206 = vunpack.c.l.b16 %v1190
    %v1207 = vunpack.c.h.b16 %v1190
    %v1208 = vunpack.c.l.b16 %v1191
    %v1209 = vunpack.c.h.b16 %v1191
    %v1210 = vunpack.c.l.b16 %v1192
    %v1211 = vunpack.c.h.b16 %v1192
    %v1212 = vunpack.c.l.b16 %v1193
    %v1213 = vunpack.c.h.b16 %v1193
    %v1214 = vunpack.c.l.b16 %v1194
    %v1215 = vunpack.c.h.b16 %v1194
    %v1216 = vunpack.c.l.b16 %v1195
    %v1217 = vunpack.c.h.b16 %v1195
    %v1218 = vunpack.c.l.b16 %v1196
    %v1219 = vunpack.c.h.b16 %v1196
    %v1220 = vunpack.c.l.b16 %v1197
    %v1221 = vunpack.c.h.b16 %v1197
    %v1222 = vpack.c.b16 %v1208, %v1206
    %v1223 = vpack.c.b16 %v1209, %v1207
    %v1224 = vpack.c.b16 %v1212, %v1210
    %v1225 = vpack.c.b16 %v1213, %v1211
    %v1226 = vpack.c.b16 %v1216, %v1214
    %v1227 = vpack.c.b16 %v1217, %v1215
    %v1228 = vpack.c.b16 %v1220, %v1218
    %v1229 = vpack.c.b16 %v1221, %v1219
    %v1239 = vsel %vm104, %v1188, 0
    %v1242 = vsel %vm104, %v1189, 0
    %1244 = vmatprep.subr.bf16.mxu0 %v1223
    %1245 = vmatpush1.bf16.msra.mxu0 %v1222
    %1246 = vmatprep.subr.bf16.mxu0 %v1225
    %1247 = vmatpush1.bf16.msra.mxu0 %v1224
    %1248 = vmatprep.subr.bf16.mxu0 %v1227
    %1249 = vmatpush1.bf16.msra.mxu0 %v1226
    %1250 = vmatprep.subr.bf16.mxu0 %v1229
    %1251 = vmatpush1.bf16.msra.mxu0 %v1228
    %1252 = vmatprep.subr.bf16.mxu0 0
    %1253 = vmatpush1.bf16.msra.mxu0 0
    %1254 = vmatprep.subr.bf16.mxu0 0
    %1255 = vmatpush1.bf16.msra.mxu0 0
    %1256 = vmatprep.subr.bf16.mxu0 0
    %1257 = vmatpush1.bf16.msra.mxu0 0
    %1258 = vmatprep.subr.bf16.mxu0 0
    %1259 = vmatpush1.bf16.msra.mxu0 0
    %1260 = vmatprep.subr.bf16.mxu0 0
    %1261 = vmatpush1.bf16.msra.mxu0 0
    %1262 = vmatprep.subr.bf16.mxu0 0
    %1263 = vmatpush1.bf16.msra.mxu0 0
    %1264 = vmatprep.subr.bf16.mxu0 0
    %1265 = vmatpush1.bf16.msra.mxu0 0
    %1266 = vmatprep.subr.bf16.mxu0 0
    %1267 = vmatpush1.bf16.msra.mxu0 0
    %1268 = vmatprep.subr.bf16.mxu0 0
    %1269 = vmatpush1.bf16.msra.mxu0 0
    %1270 = vmatprep.subr.bf16.mxu0 0
    %1271 = vmatpush1.bf16.msra.mxu0 0
    %1272 = vmatprep.subr.bf16.mxu0 0
    %1273 = vmatpush1.bf16.msra.mxu0 0
    %1274 = vmatprep.subr.bf16.mxu0 0
    %1275 = vmatpush1.bf16.msra.mxu0 0
    %1276 = vmatprep.mubr.bf16.mxu0 0
    %1277 = vmatmul.mubr.bf16.gmra.mrb[0].mxu0 %v1239
    %v1278 = vpop.f32.mrb[0].mxu0
    %v1279 = vadd.f32 0.0, %v1278
    %v1280 = vpop.f32.mrb[0].mxu0
    %v1281 = vadd.f32 0.0, %v1280
    %v1282 = vpop.f32.mrb[0].mxu0
    %v1283 = vadd.f32 0.0, %v1282
    %v1284 = vpop.f32.mrb[0].mxu0
    %v1285 = vadd.f32 0.0, %v1284
    %1286 = vmatprep.mubr.bf16.mxu0 0
    %1287 = vmatmul.mubr.bf16.gmra.mrb[0].mxu0 %v1242
    %v1288 = vpop.f32.mrb[0].mxu0
    %v1289 = vadd.f32 0.0, %v1288
    %v1290 = vpop.f32.mrb[0].mxu0
    %v1291 = vadd.f32 0.0, %v1290
    %v1292 = vpop.f32.mrb[0].mxu0
    %v1293 = vadd.f32 0.0, %v1292
    %v1294 = vpop.f32.mrb[0].mxu0
    %v1295 = vadd.f32 0.0, %v1294
    %1296 = vdwg.mxu0
    %v1297 = vld [vmem:[#allocation2 + $0xa0] sm:$0x10]
    %v1299 = vrot.slane %v1297, 4
    %v1301 = vunpack.c.l.bf16 %v1299
    %v1302 = vlaneseq
    %v1303 = vshrl.u32 %v1302, 7
    %v1304 = vsub.s32 0, %v1303
    %v1305 = vrot.slane %v1301, %v1304
    %v1306 = vadd.f32 %v1279, %v1305
    %v1307 = vadd.f32 %v1283, %v1305
    %v1308 = vadd.f32 %v1289, %v1305
    %v1309 = vadd.f32 %v1293, %v1305
    %v1310 = vlaneseq
    %v1311 = vshrl.u32 %v1310, 7
    %v1312 = vsub.s32 1, %v1311
    %v1313 = vrot.slane %v1301, %v1312
    %1315 = vrot.lane.b32.xlu0 %v1313, 64
    %v1316 = vpop.permute.xlu0 %1315
    %v1318 = vadd.f32 %v1279, %v1316
    %v1319 = vadd.f32 %v1283, %v1316
    %v1320 = vadd.f32 %v1289, %v1316
    %v1321 = vadd.f32 %v1293, %v1316
    %v1322 = vld [vmem:[#allocation2 + $0xa0] sm:$0x20]
    %v1324 = vrot.slane %v1322, 4
    %v1326 = vunpack.c.l.bf16 %v1324
    %v1327 = vlaneseq
    %v1328 = vshrl.u32 %v1327, 7
    %v1329 = vsub.s32 2, %v1328
    %v1330 = vrot.slane %v1326, %v1329
    %v1331 = vadd.f32 %v1281, %v1330
    %v1332 = vadd.f32 %v1285, %v1330
    %v1333 = vadd.f32 %v1291, %v1330
    %v1334 = vadd.f32 %v1295, %v1330
    %1339 = vrot.lane.b32.xlu0 %v1318, 64
    %v1340 = vpop.permute.xlu0 %1339
    %1341 = vrot.lane.b32.xlu0 %v1319, 64
    %v1342 = vpop.permute.xlu0 %1341
    %1343 = vrot.lane.b32.xlu0 %v1320, 64
    %v1344 = vpop.permute.xlu0 %1343
    %1345 = vrot.lane.b32.xlu0 %v1321, 64
    %v1346 = vpop.permute.xlu0 %1345
    %v1351 = vmul.f32 %v1306, %v1340
    %v1352 = vmul.f32 %v1307, %v1342
    %v1353 = vmul.f32 %v1306, %v1344
    %v1354 = vmul.f32 %v1307, %v1346
    %v1355 = vmul.f32 %v1308, %v1340
    %v1356 = vmul.f32 %v1309, %v1342
    %v1357 = vmul.f32 %v1308, %v1344
    %v1358 = vmul.f32 %v1309, %v1346
    %v1360 = vsel %vm104, %v1351, 0
    %v1363 = vsel %vm104, %v1352, 0
    %v1366 = vsel %vm104, %v1353, 0
    %v1369 = vsel %vm104, %v1354, 0
    %v1372 = vsel %vm104, %v1355, 0
    %v1375 = vsel %vm104, %v1356, 0
    %v1378 = vsel %vm104, %v1357, 0
    %v1381 = vsel %vm104, %v1358, 0
    %1383 = vmatprep.subr.mxu0 0.0
    %1384 = vmatpush1.msra.mxu0 %v50
    %1385 = vmatprep.subr.mxu0 0.0
    %1386 = vmatpush1.msra.mxu0 %v51
    %1387 = vmatprep.subr.mxu0 0.0
    %1388 = vmatpush1.msra.mxu0 %v52
    %1389 = vmatprep.subr.mxu0 0.0
    %1390 = vmatpush1.msra.mxu0 %v53
    %1391 = vmatprep.subr.mxu0 0.0
    %1392 = vmatpush1.msra.mxu0 %v54
    %1393 = vmatprep.subr.mxu0 0.0
    %1394 = vmatpush1.msra.mxu0 %v55
    %1395 = vmatprep.subr.mxu0 0.0
    %1396 = vmatpush1.msra.mxu0 %v56
    %1397 = vmatprep.subr.mxu0 0.0
    %1398 = vmatpush1.msra.mxu0 %v57
    %1399 = vmatprep.subr.mxu0 0.0
    %1400 = vmatpush1.msra.mxu0 0.0
    %1401 = vmatprep.subr.mxu0 0.0
    %1402 = vmatpush1.msra.mxu0 0.0
    %1403 = vmatprep.subr.mxu0 0.0
    %1404 = vmatpush1.msra.mxu0 0.0
    %1405 = vmatprep.subr.mxu0 0.0
    %1406 = vmatpush1.msra.mxu0 0.0
    %1407 = vmatprep.subr.mxu0 0.0
    %1408 = vmatpush1.msra.mxu0 0.0
    %1409 = vmatprep.subr.mxu0 0.0
    %1410 = vmatpush1.msra.mxu0 0.0
    %1411 = vmatprep.subr.mxu0 0.0
    %1412 = vmatpush1.msra.mxu0 0.0
    %1413 = vmatprep.subr.mxu0 0.0
    %1414 = vmatpush1.msra.mxu0 0.0
    %1415 = vmatprep.subr.mxu0 0.0
    %1416 = vmatpush1.msra.mxu0 0.0
    %1417 = vmatprep.subr.mxu0 0.0
    %1418 = vmatpush1.msra.mxu0 0.0
    %1419 = vmatprep.subr.mxu0 0.0
    %1420 = vmatpush1.msra.mxu0 0.0
    %1421 = vmatprep.subr.mxu0 0.0
    %1422 = vmatpush1.msra.mxu0 0.0
    %1423 = vmatprep.subr.mxu0 0.0
    %1424 = vmatpush1.msra.mxu0 0.0
    %1425 = vmatprep.subr.mxu0 0.0
    %1426 = vmatpush1.msra.mxu0 0.0
    %1427 = vmatprep.subr.mxu0 0.0
    %1428 = vmatpush1.msra.mxu0 0.0
    %1429 = vmatprep.subr.mxu0 0.0
    %1430 = vmatpush1.msra.mxu0 0.0
    %1431 = vmatprep.subr.mxu0 0.0
    %1432 = vmatpush1.msra.mxu0 0.0
    %1433 = vmatprep.subr.mxu0 0.0
    %1434 = vmatpush1.msra.mxu0 0.0
    %1435 = vmatprep.subr.mxu0 0.0
    %1436 = vmatpush1.msra.mxu0 0.0
    %1437 = vmatprep.subr.mxu0 0.0
    %1438 = vmatpush1.msra.mxu0 0.0
    %1439 = vmatprep.subr.mxu0 0.0
    %1440 = vmatpush1.msra.mxu0 0.0
    %1441 = vmatprep.subr.mxu0 0.0
    %1442 = vmatpush1.msra.mxu0 0.0
    %1443 = vmatprep.subr.mxu0 0.0
    %1444 = vmatpush1.msra.mxu0 0.0
    %1445 = vmatprep.subr.mxu0 0.0
    %1446 = vmatpush1.msra.mxu0 0.0
    %1447 = vmatprep.mubr.f32.mxu0 0.0
    %1448 = vmatmul.mubr.f32.gmra.mrb[0].mxu0 %v1360
    %v1449 = vpop.f32.mrb[0].mxu0
    %v1450 = vadd.f32 0.0, %v1449
    %v1451 = vpop.f32.mrb[0].mxu0
    %1452 = vmatprep.mubr.f32.mxu0 0.0
    %1453 = vmatmul.mubr.f32.gmra.mrb[0].mxu0 %v1363
    %v1454 = vpop.f32.mrb[0].mxu0
    %v1455 = vadd.f32 0.0, %v1454
    %v1456 = vpop.f32.mrb[0].mxu0
    %1457 = vmatprep.mubr.f32.mxu0 0.0
    %1458 = vmatmul.mubr.f32.gmra.mrb[0].mxu0 %v1366
    %v1459 = vpop.f32.mrb[0].mxu0
    %v1460 = vadd.f32 0.0, %v1459
    %v1461 = vpop.f32.mrb[0].mxu0
    %1462 = vmatprep.mubr.f32.mxu0 0.0
    %1463 = vmatmul.mubr.f32.gmra.mrb[0].mxu0 %v1369
    %v1464 = vpop.f32.mrb[0].mxu0
    %v1465 = vadd.f32 0.0, %v1464
    %v1466 = vpop.f32.mrb[0].mxu0
    %1467 = vmatprep.mubr.f32.mxu0 0.0
    %1468 = vmatmul.mubr.f32.gmra.mrb[0].mxu0 %v1372
    %v1469 = vpop.f32.mrb[0].mxu0
    %v1470 = vadd.f32 0.0, %v1469
    %v1471 = vpop.f32.mrb[0].mxu0
    %1472 = vmatprep.mubr.f32.mxu0 0.0
    %1473 = vmatmul.mubr.f32.gmra.mrb[0].mxu0 %v1375
    %v1474 = vpop.f32.mrb[0].mxu0
    %v1475 = vadd.f32 0.0, %v1474
    %v1476 = vpop.f32.mrb[0].mxu0
    %1477 = vmatprep.mubr.f32.mxu0 0.0
    %1478 = vmatmul.mubr.f32.gmra.mrb[0].mxu0 %v1378
    %v1479 = vpop.f32.mrb[0].mxu0
    %v1480 = vadd.f32 0.0, %v1479
    %v1481 = vpop.f32.mrb[0].mxu0
    %1482 = vmatprep.mubr.f32.mxu0 0.0
    %1483 = vmatmul.mubr.f32.gmra.mrb[0].mxu0 %v1381
    %v1484 = vpop.f32.mrb[0].mxu0
    %v1485 = vadd.f32 0.0, %v1484
    %v1486 = vpop.f32.mrb[0].mxu0
    %1487 = vdwg.mxu0
    %v1488 = vsel %vm460, %v1450, -inf
    %v1489 = vsel %vm460, %v1460, -inf
    %v1490 = vmax.f32 %v1488, %v1489
    %v1491 = vsel %vm460, %v1455, -inf
    %v1492 = vsel %vm460, %v1465, -inf
    %v1493 = vmax.f32 %v1491, %v1492
    %v1494 = vsel %vm460, %v1470, -inf
    %v1495 = vsel %vm460, %v1480, -inf
    %v1496 = vmax.f32 %v1494, %v1495
    %v1497 = vsel %vm460, %v1475, -inf
    %v1498 = vsel %vm460, %v1485, -inf
    %v1499 = vmax.f32 %v1497, %v1498
    %v1500 = vsub.f32 %v1450, %v1490
    %v1501 = vsub.f32 %v1455, %v1493
    %v1502 = vsub.f32 %v1460, %v1490
    %v1503 = vsub.f32 %v1465, %v1493
    %v1504 = vsub.f32 %v1470, %v1496
    %v1505 = vsub.f32 %v1475, %v1499
    %v1506 = vsub.f32 %v1480, %v1496
    %v1507 = vsub.f32 %v1485, %v1499
    %v1508 = vmul.f32 %v1500, 1.442695
    %v1509 = vpow.pop %v1508
    %v1510 = vmul.f32 %v1501, 1.442695
    %v1511 = vpow.pop %v1510
    %v1512 = vmul.f32 %v1502, 1.442695
    %v1513 = vpow.pop %v1512
    %v1514 = vmul.f32 %v1503, 1.442695
    %v1515 = vpow.pop %v1514
    %v1516 = vmul.f32 %v1504, 1.442695
    %v1517 = vpow.pop %v1516
    %v1518 = vmul.f32 %v1505, 1.442695
    %v1519 = vpow.pop %v1518
    %v1520 = vmul.f32 %v1506, 1.442695
    %v1521 = vpow.pop %v1520
    %v1522 = vmul.f32 %v1507, 1.442695
    %v1523 = vpow.pop %v1522
    %v1524 = vsel %vm460, %v1509, 0.0
    %v1525 = vsel %vm460, %v1513, 0.0
    %v1526 = vadd.f32 %v1524, %v1525
    %v1527 = vsel %vm460, %v1511, 0.0
    %v1528 = vsel %vm460, %v1515, 0.0
    %v1529 = vadd.f32 %v1527, %v1528
    %v1530 = vsel %vm460, %v1517, 0.0
    %v1531 = vsel %vm460, %v1521, 0.0
    %v1532 = vadd.f32 %v1530, %v1531
    %v1533 = vsel %vm460, %v1519, 0.0
    %v1534 = vsel %vm460, %v1523, 0.0
    %v1535 = vadd.f32 %v1533, %v1534
    %v1536 = vrcp.pop %v1526
    %v1537 = vmul.f32 %v1509, %v1536
    %v1538 = vrcp.pop %v1529
    %v1539 = vmul.f32 %v1511, %v1538
    %v1540 = vmul.f32 %v1513, %v1536
    %v1541 = vmul.f32 %v1515, %v1538
    %v1542 = vrcp.pop %v1532
    %v1543 = vmul.f32 %v1517, %v1542
    %v1544 = vrcp.pop %v1535
    %v1545 = vmul.f32 %v1519, %v1544
    %v1546 = vmul.f32 %v1521, %v1542
    %v1547 = vmul.f32 %v1523, %v1544
    %v1549 = vsel %vm460, %v1537, 0
    %v1552 = vsel %vm460, %v1539, 0
    %v1555 = vsel %vm460, %v1540, 0
    %v1558 = vsel %vm460, %v1541, 0
    %v1561 = vsel %vm460, %v1543, 0
    %v1564 = vsel %vm460, %v1545, 0
    %v1567 = vsel %vm460, %v1546, 0
    %v1570 = vsel %vm460, %v1547, 0
    %1572 = vmatprep.subr.mxu0 0.0
    %1573 = vmatpush1.msra.mxu0 %v547
    %1574 = vmatprep.subr.mxu0 0.0
    %1575 = vmatpush1.msra.mxu0 0.0
    %1576 = vmatprep.subr.mxu0 0.0
    %1577 = vmatpush1.msra.mxu0 0.0
    %1578 = vmatprep.subr.mxu0 0.0
    %1579 = vmatpush1.msra.mxu0 0.0
    %1580 = vmatprep.subr.mxu0 0.0
    %1581 = vmatpush1.msra.mxu0 0.0
    %1582 = vmatprep.subr.mxu0 0.0
    %1583 = vmatpush1.msra.mxu0 0.0
    %1584 = vmatprep.subr.mxu0 0.0
    %1585 = vmatpush1.msra.mxu0 0.0
    %1586 = vmatprep.subr.mxu0 0.0
    %1587 = vmatpush1.msra.mxu0 0.0
    %1588 = vmatprep.subr.mxu0 0.0
    %1589 = vmatpush1.msra.mxu0 0.0
    %1590 = vmatprep.subr.mxu0 0.0
    %1591 = vmatpush1.msra.mxu0 0.0
    %1592 = vmatprep.subr.mxu0 0.0
    %1593 = vmatpush1.msra.mxu0 0.0
    %1594 = vmatprep.subr.mxu0 0.0
    %1595 = vmatpush1.msra.mxu0 0.0
    %1596 = vmatprep.subr.mxu0 0.0
    %1597 = vmatpush1.msra.mxu0 0.0
    %1598 = vmatprep.subr.mxu0 0.0
    %1599 = vmatpush1.msra.mxu0 0.0
    %1600 = vmatprep.subr.mxu0 0.0
    %1601 = vmatpush1.msra.mxu0 0.0
    %1602 = vmatprep.subr.mxu0 0.0
    %1603 = vmatpush1.msra.mxu0 0.0
    %1604 = vmatprep.subr.mxu0 0.0
    %1605 = vmatpush1.msra.mxu0 0.0
    %1606 = vmatprep.subr.mxu0 0.0
    %1607 = vmatpush1.msra.mxu0 0.0
    %1608 = vmatprep.subr.mxu0 0.0
    %1609 = vmatpush1.msra.mxu0 0.0
    %1610 = vmatprep.subr.mxu0 0.0
    %1611 = vmatpush1.msra.mxu0 0.0
    %1612 = vmatprep.subr.mxu0 0.0
    %1613 = vmatpush1.msra.mxu0 0.0
    %1614 = vmatprep.subr.mxu0 0.0
    %1615 = vmatpush1.msra.mxu0 0.0
    %1616 = vmatprep.subr.mxu0 0.0
    %1617 = vmatpush1.msra.mxu0 0.0
    %1618 = vmatprep.subr.mxu0 0.0
    %1619 = vmatpush1.msra.mxu0 0.0
    %1620 = vmatprep.subr.mxu0 0.0
    %1621 = vmatpush1.msra.mxu0 0.0
    %1622 = vmatprep.subr.mxu0 0.0
    %1623 = vmatpush1.msra.mxu0 0.0
    %1624 = vmatprep.subr.mxu0 0.0
    %1625 = vmatpush1.msra.mxu0 0.0
    %1626 = vmatprep.subr.mxu0 0.0
    %1627 = vmatpush1.msra.mxu0 0.0
    %1628 = vmatprep.subr.mxu0 0.0
    %1629 = vmatpush1.msra.mxu0 0.0
    %1630 = vmatprep.subr.mxu0 0.0
    %1631 = vmatpush1.msra.mxu0 0.0
    %1632 = vmatprep.subr.mxu0 0.0
    %1633 = vmatpush1.msra.mxu0 0.0
    %1634 = vmatprep.subr.mxu0 0.0
    %1635 = vmatpush1.msra.mxu0 0.0
    %1636 = vmatprep.mubr.f32.mxu0 0.0
    %1637 = vmatmul.mubr.f32.gmra.mrb[0].mxu0 %v1549
    %v1638 = vpop.f32.mrb[0].mxu0
    %v1639 = vadd.f32 0.0, %v1638
    %v1640 = vpop.f32.mrb[0].mxu0
    %1641 = vmatprep.mubr.f32.mxu0 0.0
    %1642 = vmatmul.mubr.f32.gmra.mrb[0].mxu0 %v1552
    %v1643 = vpop.f32.mrb[0].mxu0
    %v1644 = vadd.f32 0.0, %v1643
    %v1645 = vpop.f32.mrb[0].mxu0
    %1646 = vmatprep.mubr.f32.mxu0 0.0
    %1647 = vmatmul.mubr.f32.gmra.mrb[0].mxu0 %v1555
    %v1648 = vpop.f32.mrb[0].mxu0
    %v1649 = vadd.f32 0.0, %v1648
    %v1650 = vpop.f32.mrb[0].mxu0
    %1651 = vmatprep.mubr.f32.mxu0 0.0
    %1652 = vmatmul.mubr.f32.gmra.mrb[0].mxu0 %v1558
    %v1653 = vpop.f32.mrb[0].mxu0
    %v1654 = vadd.f32 0.0, %v1653
    %v1655 = vpop.f32.mrb[0].mxu0
    %1656 = vmatprep.mubr.f32.mxu0 0.0
    %1657 = vmatmul.mubr.f32.gmra.mrb[0].mxu0 %v1561
    %v1658 = vpop.f32.mrb[0].mxu0
    %v1659 = vadd.f32 0.0, %v1658
    %v1660 = vpop.f32.mrb[0].mxu0
    %1661 = vmatprep.mubr.f32.mxu0 0.0
    %1662 = vmatmul.mubr.f32.gmra.mrb[0].mxu0 %v1564
    %v1663 = vpop.f32.mrb[0].mxu0
    %v1664 = vadd.f32 0.0, %v1663
    %v1665 = vpop.f32.mrb[0].mxu0
    %1666 = vmatprep.mubr.f32.mxu0 0.0
    %1667 = vmatmul.mubr.f32.gmra.mrb[0].mxu0 %v1567
    %v1668 = vpop.f32.mrb[0].mxu0
    %v1669 = vadd.f32 0.0, %v1668
    %v1670 = vpop.f32.mrb[0].mxu0
    %1671 = vmatprep.mubr.f32.mxu0 0.0
    %1672 = vmatmul.mubr.f32.gmra.mrb[0].mxu0 %v1570
    %v1673 = vpop.f32.mrb[0].mxu0
    %v1674 = vadd.f32 0.0, %v1673
    %v1675 = vpop.f32.mrb[0].mxu0
    %1676 = vdwg.mxu0
    %v1677 = vmul.f32 %v1639, %v1331
    %v1678 = vmul.f32 %v1644, %v1332
    %v1679 = vmul.f32 %v1649, %v1333
    %v1680 = vmul.f32 %v1654, %v1334
    %v1681 = vmul.f32 %v1659, %v1331
    %v1682 = vmul.f32 %v1664, %v1332
    %v1683 = vmul.f32 %v1669, %v1333
    %v1684 = vmul.f32 %v1674, %v1334
    %v1685 = vsel %vm104, %v1677, 0.0
    %v1686 = vsel %vm104, %v1679, 0.0
    %v1687 = vadd.f32 %v1685, %v1686
    %v1688 = vsel %vm104, %v1678, 0.0
    %v1689 = vsel %vm104, %v1680, 0.0
    %v1690 = vadd.f32 %v1688, %v1689
    %v1691 = vsel %vm104, %v1681, 0.0
    %v1692 = vsel %vm104, %v1683, 0.0
    %v1693 = vadd.f32 %v1691, %v1692
    %v1694 = vsel %vm104, %v1682, 0.0
    %v1695 = vsel %vm104, %v1684, 0.0
    %v1696 = vadd.f32 %v1694, %v1695
    %v1697 = vpack.c.bf16 %v1690, %v1687
    %v1698 = vpack.c.bf16 %v1696, %v1693
    %v1699 = vld [vmem:[#allocation2] sm:$0xff]
    %v1700 = vld [vmem:[#allocation2 + $0x8] sm:$0xff]
    %v1701 = vld [vmem:[#allocation2 + $0x10] sm:$0xff]
    %v1702 = vld [vmem:[#allocation2 + $0x18] sm:$0xff]
    %v1703 = vlaneseq
    %v1704 = vshrl.u32 %v1703, 7
    %v1705 = vsub.s32 3, %v1704
    %v1706 = vrot.slane %v1326, %v1705
    %v1708 = vsel %vm104, %v1697, 0
    %v1711 = vsel %vm104, %v1698, 0
    %1713 = vmatprep.subr.bf16.mxu0 0
    %1714 = vmatpush1.bf16.msra.mxu0 %v1699
    %1715 = vmatprep.subr.bf16.mxu0 0
    %1716 = vmatpush1.bf16.msra.mxu0 %v1700
    %1717 = vmatprep.subr.bf16.mxu0 0
    %1718 = vmatpush1.bf16.msra.mxu0 %v1701
    %1719 = vmatprep.subr.bf16.mxu0 0
    %1720 = vmatpush1.bf16.msra.mxu0 %v1702
    %1721 = vmatprep.subr.bf16.mxu0 0
    %1722 = vmatpush1.bf16.msra.mxu0 0
    %1723 = vmatprep.subr.bf16.mxu0 0
    %1724 = vmatpush1.bf16.msra.mxu0 0
    %1725 = vmatprep.subr.bf16.mxu0 0
    %1726 = vmatpush1.bf16.msra.mxu0 0
    %1727 = vmatprep.subr.bf16.mxu0 0
    %1728 = vmatpush1.bf16.msra.mxu0 0
    %1729 = vmatprep.subr.bf16.mxu0 0
    %1730 = vmatpush1.bf16.msra.mxu0 0
    %1731 = vmatprep.subr.bf16.mxu0 0
    %1732 = vmatpush1.bf16.msra.mxu0 0
    %1733 = vmatprep.subr.bf16.mxu0 0
    %1734 = vmatpush1.bf16.msra.mxu0 0
    %1735 = vmatprep.subr.bf16.mxu0 0
    %1736 = vmatpush1.bf16.msra.mxu0 0
    %1737 = vmatprep.subr.bf16.mxu0 0
    %1738 = vmatpush1.bf16.msra.mxu0 0
    %1739 = vmatprep.subr.bf16.mxu0 0
    %1740 = vmatpush1.bf16.msra.mxu0 0
    %1741 = vmatprep.subr.bf16.mxu0 0
    %1742 = vmatpush1.bf16.msra.mxu0 0
    %1743 = vmatprep.subr.bf16.mxu0 0
    %1744 = vmatpush1.bf16.msra.mxu0 0
    %1745 = vmatprep.mubr.bf16.mxu0 0
    %1746 = vmatmul.mubr.bf16.gmra.mrb[0].mxu0 %v1708
    %v1747 = vpop.f32.mrb[0].mxu0
    %v1748 = vadd.f32 %v1706, %v1747
    %v1749 = vpop.f32.mrb[0].mxu0
    %v1750 = vpop.f32.mrb[0].mxu0
    %v1751 = vadd.f32 %v1706, %v1750
    %v1752 = vpop.f32.mrb[0].mxu0
    %1753 = vmatprep.mubr.bf16.mxu0 0
    %1754 = vmatmul.mubr.bf16.gmra.mrb[0].mxu0 %v1711
    %v1755 = vpop.f32.mrb[0].mxu0
    %v1756 = vadd.f32 %v1706, %v1755
    %v1757 = vpop.f32.mrb[0].mxu0
    %v1758 = vpop.f32.mrb[0].mxu0
    %v1759 = vadd.f32 %v1706, %v1758
    %v1760 = vpop.f32.mrb[0].mxu0
    %1761 = vdwg.mxu0
    %v1762 = vadd.f32 %v1180, %v1748
    %v1763 = vadd.f32 %v1181, %v1751
    %v1764 = vadd.f32 %v1182, %v1756
    %v1765 = vadd.f32 %v1183, %v1759
    %v1766 = vld [vmem:[#allocation2 + $0xa0] sm:$0x40]
    %v1767 = vsel %vm104, %v1762, 0.0
    %1768 = vadd.xlane.f32.xlu0 %v1767
    %v1769 = vpop.xlane.xlu0 %1768
    %v1770 = vsel %vm104, %v1763, 0.0
    %1771 = vadd.xlane.f32.xlu0 %v1770
    %v1772 = vpop.xlane.xlu0 %1771
    %v1773 = vsel %vm104, %v1764, 0.0
    %1774 = vadd.xlane.f32.xlu0 %v1773
    %v1775 = vpop.xlane.xlu0 %1774
    %v1776 = vsel %vm104, %v1765, 0.0
    %1777 = vadd.xlane.f32.xlu0 %v1776
    %v1778 = vpop.xlane.xlu0 %1777
    %v1779 = vmul.f32 %v1769, %v800
    %v1780 = vmul.f32 %v1772, %v800
    %v1781 = vmul.f32 %v1775, %v800
    %v1782 = vmul.f32 %v1778, %v800
    %v1783 = vsub.f32 %v1762, %v1779
    %v1784 = vsub.f32 %v1763, %v1780
    %v1785 = vsub.f32 %v1764, %v1781
    %v1786 = vsub.f32 %v1765, %v1782
    %v1787 = vmul.f32 %v1783, %v1783
    %v1788 = vmul.f32 %v1784, %v1784
    %v1789 = vmul.f32 %v1785, %v1785
    %v1790 = vmul.f32 %v1786, %v1786
    %v1791 = vsel %vm104, %v1787, 0.0
    %1792 = vadd.xlane.f32.xlu0 %v1791
    %v1793 = vpop.xlane.xlu0 %1792
    %v1794 = vsel %vm104, %v1788, 0.0
    %1795 = vadd.xlane.f32.xlu0 %v1794
    %v1796 = vpop.xlane.xlu0 %1795
    %v1797 = vsel %vm104, %v1789, 0.0
    %1798 = vadd.xlane.f32.xlu0 %v1797
    %v1799 = vpop.xlane.xlu0 %1798
    %v1800 = vsel %vm104, %v1790, 0.0
    %1801 = vadd.xlane.f32.xlu0 %v1800
    %v1802 = vpop.xlane.xlu0 %1801
    %v1803 = vmul.f32 %v1793, %v800
    %v1804 = vmul.f32 %v1796, %v800
    %v1805 = vmul.f32 %v1799, %v800
    %v1806 = vmul.f32 %v1802, %v800
    %v1807 = vadd.f32 %v1803, 1e-05
    %v1808 = vadd.f32 %v1804, 1e-05
    %v1809 = vadd.f32 %v1805, 1e-05
    %v1810 = vadd.f32 %v1806, 1e-05
    %v1811 = vrsqrt.pop %v1807
    %v1812 = vrsqrt.pop %v1808
    %v1813 = vrsqrt.pop %v1809
    %v1814 = vrsqrt.pop %v1810
    %v1815 = vmul.f32 %v1783, %v1811
    %v1816 = vmul.f32 %v1784, %v1812
    %v1817 = vmul.f32 %v1785, %v1813
    %v1818 = vmul.f32 %v1786, %v1814
    %v1820 = vrot.slane %v1766, 4
    %v1822 = vunpack.c.l.bf16 %v1820
    %v1823 = vlaneseq
    %v1824 = vshrl.u32 %v1823, 7
    %v1825 = vsub.s32 4, %v1824
    %v1826 = vrot.slane %v1822, %v1825
    %v1827 = vmul.f32 %v1815, %v1826
    %v1828 = vmul.f32 %v1816, %v1826
    %v1829 = vmul.f32 %v1817, %v1826
    %v1830 = vmul.f32 %v1818, %v1826
    %v1831 = vlaneseq
    %v1832 = vshrl.u32 %v1831, 7
    %v1833 = vsub.s32 5, %v1832
    %v1834 = vrot.slane %v1822, %v1833
    %v1835 = vadd.f32 %v1827, %v1834
    %v1836 = vadd.f32 %v1828, %v1834
    %v1837 = vadd.f32 %v1829, %v1834
    %v1838 = vadd.f32 %v1830, %v1834
    %v1839 = vpack.c.bf16 %v1836, %v1835
    %v1840 = vpack.c.bf16 %v1838, %v1837
    %v1841 = vld [vmem:[#allocation2 + $0x20] sm:$0xff]
    %v1842 = vld [vmem:[#allocation2 + $0x28] sm:$0xff]
    %v1843 = vld [vmem:[#allocation2 + $0x30] sm:$0xff]
    %v1844 = vld [vmem:[#allocation2 + $0x38] sm:$0xff]
    %v1845 = vld [vmem:[#allocation2 + $0xa0] sm:$0x80]
    %v1847 = vrot.slane %v1845, 4
    %v1849 = vunpack.c.l.bf16 %v1847
    %v1850 = vlaneseq
    %v1851 = vshrl.u32 %v1850, 7
    %v1852 = vsub.s32 6, %v1851
    %v1853 = vrot.slane %v1849, %v1852
    %v1855 = vsel %vm104, %v1839, 0
    %v1858 = vsel %vm104, %v1840, 0
    %1860 = vmatprep.subr.bf16.mxu0 0
    %1861 = vmatpush1.bf16.msra.mxu0 %v1841
    %1862 = vmatprep.subr.bf16.mxu0 0
    %1863 = vmatpush1.bf16.msra.mxu0 %v1842
    %1864 = vmatprep.subr.bf16.mxu0 0
    %1865 = vmatpush1.bf16.msra.mxu0 %v1843
    %1866 = vmatprep.subr.bf16.mxu0 0
    %1867 = vmatpush1.bf16.msra.mxu0 %v1844
    %1868 = vmatprep.subr.bf16.mxu0 0
    %1869 = vmatpush1.bf16.msra.mxu0 0
    %1870 = vmatprep.subr.bf16.mxu0 0
    %1871 = vmatpush1.bf16.msra.mxu0 0
    %1872 = vmatprep.subr.bf16.mxu0 0
    %1873 = vmatpush1.bf16.msra.mxu0 0
    %1874 = vmatprep.subr.bf16.mxu0 0
    %1875 = vmatpush1.bf16.msra.mxu0 0
    %1876 = vmatprep.subr.bf16.mxu0 0
    %1877 = vmatpush1.bf16.msra.mxu0 0
    %1878 = vmatprep.subr.bf16.mxu0 0
    %1879 = vmatpush1.bf16.msra.mxu0 0
    %1880 = vmatprep.subr.bf16.mxu0 0
    %1881 = vmatpush1.bf16.msra.mxu0 0
    %1882 = vmatprep.subr.bf16.mxu0 0
    %1883 = vmatpush1.bf16.msra.mxu0 0
    %1884 = vmatprep.subr.bf16.mxu0 0
    %1885 = vmatpush1.bf16.msra.mxu0 0
    %1886 = vmatprep.subr.bf16.mxu0 0
    %1887 = vmatpush1.bf16.msra.mxu0 0
    %1888 = vmatprep.subr.bf16.mxu0 0
    %1889 = vmatpush1.bf16.msra.mxu0 0
    %1890 = vmatprep.subr.bf16.mxu0 0
    %1891 = vmatpush1.bf16.msra.mxu0 0
    %1892 = vmatprep.mubr.bf16.mxu0 0
    %1893 = vmatmul.mubr.bf16.gmra.mrb[0].mxu0 %v1855
    %v1894 = vpop.f32.mrb[0].mxu0
    %v1895 = vadd.f32 %v1853, %v1894
    %v1896 = vpop.f32.mrb[0].mxu0
    %v1897 = vpop.f32.mrb[0].mxu0
    %v1898 = vadd.f32 %v1853, %v1897
    %v1899 = vpop.f32.mrb[0].mxu0
    %1900 = vmatprep.mubr.bf16.mxu0 0
    %1901 = vmatmul.mubr.bf16.gmra.mrb[0].mxu0 %v1858
    %v1902 = vpop.f32.mrb[0].mxu0
    %v1903 = vadd.f32 %v1853, %v1902
    %v1904 = vpop.f32.mrb[0].mxu0
    %v1905 = vpop.f32.mrb[0].mxu0
    %v1906 = vadd.f32 %v1853, %v1905
    %v1907 = vpop.f32.mrb[0].mxu0
    %1908 = vdwg.mxu0
    %v1909 = vmax.f32 %v1895, 0.0
    %v1910 = vmax.f32 %v1898, 0.0
    %v1911 = vmax.f32 %v1903, 0.0
    %v1912 = vmax.f32 %v1906, 0.0
    %v1913 = vpack.c.bf16 %v1910, %v1909
    %v1914 = vpack.c.bf16 %v1912, %v1911
    %v1915 = vld [vmem:[#allocation2 + $0x40] sm:$0xff]
    %v1916 = vld [vmem:[#allocation2 + $0x48] sm:$0xff]
    %v1917 = vld [vmem:[#allocation2 + $0x50] sm:$0xff]
    %v1918 = vld [vmem:[#allocation2 + $0x58] sm:$0xff]
    %v1919 = vld [vmem:[#allocation2 + $0x60] sm:$0xff]
    %v1920 = vld [vmem:[#allocation2 + $0x68] sm:$0xff]
    %v1921 = vld [vmem:[#allocation2 + $0x70] sm:$0xff]
    %v1922 = vld [vmem:[#allocation2 + $0x78] sm:$0xff]
    %v1923 = vlaneseq
    %v1924 = vshrl.u32 %v1923, 7
    %v1925 = vsub.s32 7, %v1924
    %v1926 = vrot.slane %v1849, %v1925
    %1927 = vmatprep.subr.bf16.mxu0 0
    %1928 = vmatpush1.bf16.msra.mxu0 %v1915
    %1929 = vmatprep.subr.bf16.mxu0 0
    %1930 = vmatpush1.bf16.msra.mxu0 %v1916
    %1931 = vmatprep.subr.bf16.mxu0 0
    %1932 = vmatpush1.bf16.msra.mxu0 %v1917
    %1933 = vmatprep.subr.bf16.mxu0 0
    %1934 = vmatpush1.bf16.msra.mxu0 %v1918
    %1935 = vmatprep.subr.bf16.mxu0 0
    %1936 = vmatpush1.bf16.msra.mxu0 %v1919
    %1937 = vmatprep.subr.bf16.mxu0 0
    %1938 = vmatpush1.bf16.msra.mxu0 %v1920
    %1939 = vmatprep.subr.bf16.mxu0 0
    %1940 = vmatpush1.bf16.msra.mxu0 %v1921
    %1941 = vmatprep.subr.bf16.mxu0 0
    %1942 = vmatpush1.bf16.msra.mxu0 %v1922
    %1943 = vmatprep.subr.bf16.mxu0 0
    %1944 = vmatpush1.bf16.msra.mxu0 0
    %1945 = vmatprep.subr.bf16.mxu0 0
    %1946 = vmatpush1.bf16.msra.mxu0 0
    %1947 = vmatprep.subr.bf16.mxu0 0
    %1948 = vmatpush1.bf16.msra.mxu0 0
    %1949 = vmatprep.subr.bf16.mxu0 0
    %1950 = vmatpush1.bf16.msra.mxu0 0
    %1951 = vmatprep.subr.bf16.mxu0 0
    %1952 = vmatpush1.bf16.msra.mxu0 0
    %1953 = vmatprep.subr.bf16.mxu0 0
    %1954 = vmatpush1.bf16.msra.mxu0 0
    %1955 = vmatprep.subr.bf16.mxu0 0
    %1956 = vmatpush1.bf16.msra.mxu0 0
    %1957 = vmatprep.subr.bf16.mxu0 0
    %1958 = vmatpush1.bf16.msra.mxu0 0
    %1959 = vmatprep.mubr.bf16.mxu0 0
    %1960 = vmatmul.mubr.bf16.gmra.mrb[0].mxu0 %v1913
    %v1961 = vpop.f32.mrb[0].mxu0
    %v1962 = vadd.f32 %v1926, %v1961
    %v1963 = vpop.f32.mrb[0].mxu0
    %v1964 = vpop.f32.mrb[0].mxu0
    %v1965 = vadd.f32 %v1926, %v1964
    %v1966 = vpop.f32.mrb[0].mxu0
    %1967 = vmatprep.mubr.bf16.mxu0 0
    %1968 = vmatmul.mubr.bf16.gmra.mrb[0].mxu0 %v1914
    %v1969 = vpop.f32.mrb[0].mxu0
    %v1970 = vadd.f32 %v1926, %v1969
    %v1971 = vpop.f32.mrb[0].mxu0
    %v1972 = vpop.f32.mrb[0].mxu0
    %v1973 = vadd.f32 %v1926, %v1972
    %v1974 = vpop.f32.mrb[0].mxu0
    %1975 = vdwg.mxu0
    %v1976 = vadd.f32 %v1835, %v1962
    %v1977 = vadd.f32 %v1836, %v1965
    %v1978 = vadd.f32 %v1837, %v1970
    %v1979 = vadd.f32 %v1838, %v1973
    %v1980 = vld [vmem:[#allocation2 + $0xa8] sm:$0x1]
    %v1981 = vsel %vm104, %v1976, 0.0
    %1982 = vadd.xlane.f32.xlu0 %v1981
    %v1983 = vpop.xlane.xlu0 %1982
    %v1984 = vsel %vm104, %v1977, 0.0
    %1985 = vadd.xlane.f32.xlu0 %v1984
    %v1986 = vpop.xlane.xlu0 %1985
    %v1987 = vsel %vm104, %v1978, 0.0
    %1988 = vadd.xlane.f32.xlu0 %v1987
    %v1989 = vpop.xlane.xlu0 %1988
    %v1990 = vsel %vm104, %v1979, 0.0
    %1991 = vadd.xlane.f32.xlu0 %v1990
    %v1992 = vpop.xlane.xlu0 %1991
    %v1993 = vmul.f32 %v1983, %v800
    %v1994 = vmul.f32 %v1986, %v800
    %v1995 = vmul.f32 %v1989, %v800
    %v1996 = vmul.f32 %v1992, %v800
    %v1997 = vsub.f32 %v1976, %v1993
    %v1998 = vsub.f32 %v1977, %v1994
    %v1999 = vsub.f32 %v1978, %v1995
    %v2000 = vsub.f32 %v1979, %v1996
    %v2001 = vmul.f32 %v1997, %v1997
    %v2002 = vmul.f32 %v1998, %v1998
    %v2003 = vmul.f32 %v1999, %v1999
    %v2004 = vmul.f32 %v2000, %v2000
    %v2005 = vsel %vm104, %v2001, 0.0
    %2006 = vadd.xlane.f32.xlu0 %v2005
    %v2007 = vpop.xlane.xlu0 %2006
    %v2008 = vsel %vm104, %v2002, 0.0
    %2009 = vadd.xlane.f32.xlu0 %v2008
    %v2010 = vpop.xlane.xlu0 %2009
    %v2011 = vsel %vm104, %v2003, 0.0
    %2012 = vadd.xlane.f32.xlu0 %v2011
    %v2013 = vpop.xlane.xlu0 %2012
    %v2014 = vsel %vm104, %v2004, 0.0
    %2015 = vadd.xlane.f32.xlu0 %v2014
    %v2016 = vpop.xlane.xlu0 %2015
    %v2017 = vmul.f32 %v2007, %v800
    %v2018 = vmul.f32 %v2010, %v800
    %v2019 = vmul.f32 %v2013, %v800
    %v2020 = vmul.f32 %v2016, %v800
    %v2021 = vadd.f32 %v2017, 1e-05
    %v2022 = vadd.f32 %v2018, 1e-05
    %v2023 = vadd.f32 %v2019, 1e-05
    %v2024 = vadd.f32 %v2020, 1e-05
    %v2025 = vrsqrt.pop %v2021
    %v2026 = vrsqrt.pop %v2022
    %v2027 = vrsqrt.pop %v2023
    %v2028 = vrsqrt.pop %v2024
    %v2029 = vmul.f32 %v1997, %v2025
    %v2030 = vmul.f32 %v1998, %v2026
    %v2031 = vmul.f32 %v1999, %v2027
    %v2032 = vmul.f32 %v2000, %v2028
    %v2033 = vunpack.c.l.bf16 %v1980
    %v2034 = vlaneseq
    %v2035 = vshrl.u32 %v2034, 7
    %v2036 = vsub.s32 0, %v2035
    %v2037 = vrot.slane %v2033, %v2036
    %v2038 = vmul.f32 %v2029, %v2037
    %v2039 = vmul.f32 %v2030, %v2037
    %v2040 = vmul.f32 %v2031, %v2037
    %v2041 = vmul.f32 %v2032, %v2037
    %v2042 = vlaneseq
    %v2043 = vshrl.u32 %v2042, 7
    %v2044 = vsub.s32 1, %v2043
    %v2045 = vrot.slane %v2033, %v2044
    %v2046 = vadd.f32 %v2038, %v2045
    %v2047 = vadd.f32 %v2039, %v2045
    %v2048 = vadd.f32 %v2040, %v2045
    %v2049 = vadd.f32 %v2041, %v2045
    %v2050 = vld [vmem:[#allocation2 + $0xa0] sm:$0xf]
    %v2051 = vunpack.c.l.bf16 %v2050
    %vm2052 = vcmask 261120
    %v2054 = vsel %vm2052, %v2051, 0
    %2056 = vmatprep.subr.mxu0 0.0
    %2057 = vmatpush1.msra.mxu0 %v2046
    %2058 = vmatprep.subr.mxu0 0.0
    %2059 = vmatpush1.msra.mxu0 %v2047
    %2060 = vmatprep.subr.mxu0 0.0
    %2061 = vmatpush1.msra.mxu0 %v2048
    %2062 = vmatprep.subr.mxu0 0.0
    %2063 = vmatpush1.msra.mxu0 %v2049
    %2064 = vmatprep.subr.mxu0 0.0
    %2065 = vmatpush1.msra.mxu0 0.0
    %2066 = vmatprep.subr.mxu0 0.0
    %2067 = vmatpush1.msra.mxu0 0.0
    %2068 = vmatprep.subr.mxu0 0.0
    %2069 = vmatpush1.msra.mxu0 0.0
    %2070 = vmatprep.subr.mxu0 0.0
    %2071 = vmatpush1.msra.mxu0 0.0
    %2072 = vmatprep.subr.mxu0 0.0
    %2073 = vmatpush1.msra.mxu0 0.0
    %2074 = vmatprep.subr.mxu0 0.0
    %2075 = vmatpush1.msra.mxu0 0.0
    %2076 = vmatprep.subr.mxu0 0.0
    %2077 = vmatpush1.msra.mxu0 0.0
    %2078 = vmatprep.subr.mxu0 0.0
    %2079 = vmatpush1.msra.mxu0 0.0
    %2080 = vmatprep.subr.mxu0 0.0
    %2081 = vmatpush1.msra.mxu0 0.0
    %2082 = vmatprep.subr.mxu0 0.0
    %2083 = vmatpush1.msra.mxu0 0.0
    %2084 = vmatprep.subr.mxu0 0.0
    %2085 = vmatpush1.msra.mxu0 0.0
    %2086 = vmatprep.subr.mxu0 0.0
    %2087 = vmatpush1.msra.mxu0 0.0
    %2088 = vmatprep.subr.mxu0 0.0
    %2089 = vmatpush1.msra.mxu0 0.0
    %2090 = vmatprep.subr.mxu0 0.0
    %2091 = vmatpush1.msra.mxu0 0.0
    %2092 = vmatprep.subr.mxu0 0.0
    %2093 = vmatpush1.msra.mxu0 0.0
    %2094 = vmatprep.subr.mxu0 0.0
    %2095 = vmatpush1.msra.mxu0 0.0
    %2096 = vmatprep.subr.mxu0 0.0
    %2097 = vmatpush1.msra.mxu0 0.0
    %2098 = vmatprep.subr.mxu0 0.0
    %2099 = vmatpush1.msra.mxu0 0.0
    %2100 = vmatprep.subr.mxu0 0.0
    %2101 = vmatpush1.msra.mxu0 0.0
    %2102 = vmatprep.subr.mxu0 0.0
    %2103 = vmatpush1.msra.mxu0 0.0
    %2104 = vmatprep.subr.mxu0 0.0
    %2105 = vmatpush1.msra.mxu0 0.0
    %2106 = vmatprep.subr.mxu0 0.0
    %2107 = vmatpush1.msra.mxu0 0.0
    %2108 = vmatprep.subr.mxu0 0.0
    %2109 = vmatpush1.msra.mxu0 0.0
    %2110 = vmatprep.subr.mxu0 0.0
    %2111 = vmatpush1.msra.mxu0 0.0
    %2112 = vmatprep.subr.mxu0 0.0
    %2113 = vmatpush1.msra.mxu0 0.0
    %2114 = vmatprep.subr.mxu0 0.0
    %2115 = vmatpush1.msra.mxu0 0.0
    %2116 = vmatprep.subr.mxu0 0.0
    %2117 = vmatpush1.msra.mxu0 0.0
    %2118 = vmatprep.subr.mxu0 0.0
    %2119 = vmatpush1.msra.mxu0 0.0
    %2120 = vmatprep.mubr.f32.mxu0 0.0
    %2121 = vmatmul.mubr.f32.gmra.mrb[0].mxu0 %v2054
    %v2122 = vpop.f32.mrb[0].mxu0
    %v2123 = vadd.f32 0.0, %v2122
    %v2124 = vpop.f32.mrb[0].mxu0
    %2125 = vdwg.mxu0
    %v2126 = vpack.c.bf16 %v2123, %v2123
    %v2127 = vld [vmem:[#allocation2 + $0x80] sm:$0xff]
    %v2128 = vld [vmem:[#allocation2 + $0x88] sm:$0xff]
    %v2129 = vld [vmem:[#allocation2 + $0x90] sm:$0xff]
    %v2130 = vld [vmem:[#allocation2 + $0x98] sm:$0xff]
    %v2131 = vld [vmem:[#allocation2 + $0xa8] sm:$0x2]
    %v2132 = vunpack.c.l.bf16 %v2131
    %v2133 = vlaneseq
    %v2134 = vshrl.u32 %v2133, 7
    %v2135 = vsub.s32 2, %v2134
    %v2136 = vrot.slane %v2132, %v2135
    %v2138 = vsel %vm104, %v2126, 0
    %2140 = vmatprep.subr.bf16.mxu0 0
    %2141 = vmatpush1.bf16.msra.mxu0 %v2127
    %2142 = vmatprep.subr.bf16.mxu0 0
    %2143 = vmatpush1.bf16.msra.mxu0 %v2128
    %2144 = vmatprep.subr.bf16.mxu0 0
    %2145 = vmatpush1.bf16.msra.mxu0 %v2129
    %2146 = vmatprep.subr.bf16.mxu0 0
    %2147 = vmatpush1.bf16.msra.mxu0 %v2130
    %2148 = vmatprep.subr.bf16.mxu0 0
    %2149 = vmatpush1.bf16.msra.mxu0 0
    %2150 = vmatprep.subr.bf16.mxu0 0
    %2151 = vmatpush1.bf16.msra.mxu0 0
    %2152 = vmatprep.subr.bf16.mxu0 0
    %2153 = vmatpush1.bf16.msra.mxu0 0
    %2154 = vmatprep.subr.bf16.mxu0 0
    %2155 = vmatpush1.bf16.msra.mxu0 0
    %2156 = vmatprep.subr.bf16.mxu0 0
    %2157 = vmatpush1.bf16.msra.mxu0 0
    %2158 = vmatprep.subr.bf16.mxu0 0
    %2159 = vmatpush1.bf16.msra.mxu0 0
    %2160 = vmatprep.subr.bf16.mxu0 0
    %2161 = vmatpush1.bf16.msra.mxu0 0
    %2162 = vmatprep.subr.bf16.mxu0 0
    %2163 = vmatpush1.bf16.msra.mxu0 0
    %2164 = vmatprep.subr.bf16.mxu0 0
    %2165 = vmatpush1.bf16.msra.mxu0 0
    %2166 = vmatprep.subr.bf16.mxu0 0
    %2167 = vmatpush1.bf16.msra.mxu0 0
    %2168 = vmatprep.subr.bf16.mxu0 0
    %2169 = vmatpush1.bf16.msra.mxu0 0
    %2170 = vmatprep.subr.bf16.mxu0 0
    %2171 = vmatpush1.bf16.msra.mxu0 0
    %2172 = vmatprep.mubr.bf16.mxu0 0
    %2173 = vmatmul.mubr.bf16.gmra.mrb[0].mxu0 %v2138
    %v2174 = vpop.f32.mrb[0].mxu0
    %v2175 = vadd.f32 %v2136, %v2174
    %v2176 = vpop.f32.mrb[0].mxu0
    %v2177 = vpop.f32.mrb[0].mxu0
    %v2178 = vpop.f32.mrb[0].mxu0
    %2179 = vdwg.mxu0
    %2180 = vst [vmem:[#allocation7] sm:$0xff] %v2175
    // Predicated region
    $region22: #{tpu_custom_call.1} parent=1 // pred_check
      _
    $region23: #{tpu_custom_call.1} parent=1 // pred_check_branch
      %2182 = sbr.rel (0) target = $region25
    $region24: #{tpu_custom_call.1} parent=1 // pred_region
      %s2184 = ssub.s32 128, 128
      %2185 = vsyncadd [#allocation6], %s2184
      %s2187 = sshll.u32 [#allocation7], 4
      %s2188 = int_to_ptr.vmem [resolvable:$true] %s2187
      %2190 = dma.vmem_to_hbm [thread:$0]  %s2188, 128, %s4, [#allocation6]
    $region25: #{tpu_custom_call.1} parent=1 // pred_fallthru
      _
    // Predicated region
    $region26: #{tpu_custom_call.1} parent=1 // pred_check
      _
    $region27: #{tpu_custom_call.1} parent=1 // pred_check_branch
      %2192 = sbr.rel (0) target = $region29
    $region28: #{tpu_custom_call.1} parent=1 // pred_region
      %2193 = dma.done [#allocation6], 128
    $region29: #{tpu_custom_call.1} parent=1 // pred_fallthru
      _
    %2194 = vsyncpa [#allocation5], 1
    %2195 = vsyncpa [#allocation6], 1
  %2196 = vsyncmov [#allocation3]
  %s2197 = vpop.sfrf %2196
  %p2198 = scmp.eq.s32.totalorder %s2197, 0
  %p2199 = pneg %p2198
  %2201 = shalt.err (%p2199)

</llo_original>
